<compile_context>
chip_gen: v7x
topology: tpu7x:2x2x1
jax: 0.10.0
libtpu: 0.0.40
codegen_flags: <defaults>
</compile_context>

<pallas_src>
import jax
import jax.numpy as jnp
from jax.experimental import pallas as pl
from jax.experimental.pallas import tpu as pltpu

EPS = 1e-3

# Per-tile VMEM budget for one x block (output block is the same size; both are
# double-buffered, so peak ~4x this + small gamma/beta blocks).  8 MiB keeps us
# comfortably under the 32 MiB scoped default on all generations (and v7x's
# 64 MiB physical VMEM).
_TILE_BYTES_BUDGET = 8 * 1024 * 1024


def _bn_kernel(x_ref, g_ref, b_ref, o_ref):
    # x_ref: (N, C_TILE, L)   g_ref/b_ref: (1, C_TILE, 1)   o_ref: (N, C_TILE, L)
    x = x_ref[...].astype(jnp.float32)
    inv_count = 1.0 / (x.shape[0] * x.shape[2])
    mean = jnp.sum(x, axis=(0, 2), keepdims=True) * inv_count      # (1, Ct, 1)
    centered = x - mean
    var = jnp.sum(centered * centered, axis=(0, 2), keepdims=True) * inv_count
    inv = jax.lax.rsqrt(var + EPS)                                  # (1, Ct, 1)
    # Fold gamma into the (1, Ct, 1) scale before broadcasting over (N, Ct, L).
    scale = inv * g_ref[...]
    o_ref[...] = (centered * scale + b_ref[...]).astype(o_ref.dtype)


def _pick_c_tile(N, C, L, itemsize):
    """Largest channel tile that divides C, is a multiple of 8, fits the VMEM
    budget, and (when possible) leaves >=2 grid steps so both v7x TensorCores
    get work."""
    best_any = None      # largest feasible tile (grid may be 1)
    best_multi = None    # largest feasible tile with grid >= 2
    for cand in range(8, C + 1, 8):
        if C % cand:
            continue
        tile_bytes = N * cand * L * itemsize
        if tile_bytes > _TILE_BYTES_BUDGET:
            continue
        best_any = cand
        if C // cand >= 2:
            best_multi = cand
    if best_multi is not None:
        return best_multi
    if best_any is not None:
        return best_any
    return 8


def batchnorm2d_pallas(x_nchw, gamma, beta, *, c_tile=None):
    # TODO(synk): running_mean / running_var are neither used nor updated
    # (training-mode batch statistics only, matching the module's forward output).
    N, C, H, W = x_nchw.shape
    L = H * W
    itemsize = jnp.dtype(x_nchw.dtype).itemsize

    if c_tile is None:
        c_tile = _pick_c_tile(N, C, L, itemsize)
    assert C % c_tile == 0 and c_tile % 8 == 0, "bad channel tile"

    # Guard against VMEM blow-up at scaled-up shapes (large N*H*W).
    # TODO(synk): add an L-tiled sum/sumsq accumulation path (second grid axis,
    # 'arbitrary', pl.when finalize) for shapes where even c_tile=8 is too big.
    assert N * c_tile * L * itemsize <= 2 * _TILE_BYTES_BUDGET, (
        "x tile too large for VMEM; needs an L-tiled accumulation path")

    # Layout-preserving reshapes only -- no HBM transpose.
    x3d = x_nchw.reshape(N, C, L)
    g3d = gamma.reshape(1, C, 1).astype(jnp.float32)
    b3d = beta.reshape(1, C, 1).astype(jnp.float32)

    grid = (C // c_tile,)
    out3d = pl.pallas_call(
        _bn_kernel,
        out_shape=jax.ShapeDtypeStruct((N, C, L), x_nchw.dtype),
        grid_spec=pltpu.PrefetchScalarGridSpec(
            num_scalar_prefetch=0,
            grid=grid,
            in_specs=[
                pl.BlockSpec((N, c_tile, L), lambda i: (0, i, 0)),
                pl.BlockSpec((1, c_tile, 1), lambda i: (0, i, 0)),
                pl.BlockSpec((1, c_tile, 1), lambda i: (0, i, 0)),
            ],
            out_specs=pl.BlockSpec((N, c_tile, L), lambda i: (0, i, 0)),
        ),
        compiler_params=pltpu.CompilerParams(
            dimension_semantics=("parallel",)),
    )(x3d, g3d, b3d)

    return out3d.reshape(N, C, H, W)


def batchnorm2d_ref(x_nchw, gamma, beta):
    x = x_nchw.astype(jnp.float32)
    mean = jnp.mean(x, axis=(0, 2, 3), keepdims=True)
    var = jnp.mean((x - mean) ** 2, axis=(0, 2, 3), keepdims=True)
    g = gamma.reshape(1, -1, 1, 1)
    b = beta.reshape(1, -1, 1, 1)
    return ((x - mean) * jax.lax.rsqrt(var + EPS) * g + b).astype(x_nchw.dtype)


if __name__ == "__main__":
    # Shapes consistent with the module: BatchNorm2d(432) on [1, 432, 28, 28].
    N, C, H, W = 1, 432, 28, 28
    key = jax.random.PRNGKey(0)
    kx, kg, kb = jax.random.split(key, 3)

    x = jax.random.normal(kx, (N, C, H, W), dtype=jnp.float32)
    # Deterministic non-trivial affine parameters (PyTorch default would be 1/0).
    gamma = 1.0 + 0.01 * jax.random.normal(kg, (C,), dtype=jnp.float32)
    beta = 0.01 * jax.random.normal(kb, (C,), dtype=jnp.float32)

    out = batchnorm2d_pallas(x, gamma, beta)
    out = jax.block_until_ready(out)

    ref = batchnorm2d_ref(x, gamma, beta)
    assert out.shape == (N, C, H, W)
    assert jnp.max(jnp.abs(out - ref)) < 1e-4

    print("KERNEL_OK")
</pallas_src>

<mosaic_0001>
module attributes {stable_mosaic.version = 11 : i64} {
  func.func @_bn_kernel(%arg0: i32, %arg1: memref<1x216x784xf32, #tpu.memory_space<vmem>>, %arg2: memref<1x216x1xf32, #tpu.memory_space<vmem>>, %arg3: memref<1x216x1xf32, #tpu.memory_space<vmem>>, %arg4: memref<1x216x784xf32, #tpu.memory_space<vmem>>) attributes {dimension_semantics = [#tpu.dimension_semantics<parallel>], iteration_bounds = array<i64: 2>, scalar_prefetch = 0 : i64, scratch_operands = 0 : i64, tpu.core_type = #tpu.core_type<tc>, window_params = [{transform_indices = @transform_0, window_bounds = array<i64: 1, 216, 784>}, {transform_indices = @transform_1, window_bounds = array<i64: 1, 216, 1>}, {transform_indices = @transform_2, window_bounds = array<i64: 1, 216, 1>}, {transform_indices = @transform_3, window_bounds = array<i64: 1, 216, 784>}]} {
    %c0 = arith.constant 0 : index
    %c0_0 = arith.constant 0 : index
    %c0_1 = arith.constant 0 : index
    %0 = vector.load %arg1[%c0, %c0_0, %c0_1] : memref<1x216x784xf32, #tpu.memory_space<vmem>>, vector<1x216x784xf32>
    %cst = arith.constant dense<0.000000e+00> : vector<216xf32>
    %1 = vector.multi_reduction <add>, %0, %cst [0, 2] : vector<1x216x784xf32> to vector<216xf32>
    %2 = vector.shape_cast %1 : vector<216xf32> to vector<1x216x1xf32>
    %cst_2 = arith.constant 0.00127551018 : f32
    %3 = vector.broadcast %cst_2 : f32 to vector<1x216x1xf32>
    %4 = arith.mulf %2, %3 : vector<1x216x1xf32>
    %5 = vector.broadcast %4 : vector<1x216x1xf32> to vector<1x216x784xf32>
    %6 = arith.subf %0, %5 : vector<1x216x784xf32>
    %7 = arith.mulf %6, %6 : vector<1x216x784xf32>
    %cst_3 = arith.constant dense<0.000000e+00> : vector<216xf32>
    %8 = vector.multi_reduction <add>, %7, %cst_3 [0, 2] : vector<1x216x784xf32> to vector<216xf32>
    %9 = vector.shape_cast %8 : vector<216xf32> to vector<1x216x1xf32>
    %cst_4 = arith.constant 0.00127551018 : f32
    %10 = vector.broadcast %cst_4 : f32 to vector<1x216x1xf32>
    %11 = arith.mulf %9, %10 : vector<1x216x1xf32>
    %cst_5 = arith.constant 1.000000e-03 : f32
    %12 = vector.broadcast %cst_5 : f32 to vector<1x216x1xf32>
    %13 = arith.addf %11, %12 : vector<1x216x1xf32>
    %14 = math.rsqrt %13 : vector<1x216x1xf32>
    %c0_6 = arith.constant 0 : index
    %c0_7 = arith.constant 0 : index
    %c0_8 = arith.constant 0 : index
    %15 = vector.load %arg2[%c0_6, %c0_7, %c0_8] : memref<1x216x1xf32, #tpu.memory_space<vmem>>, vector<1x216x1xf32>
    %16 = arith.mulf %14, %15 : vector<1x216x1xf32>
    %17 = vector.broadcast %16 : vector<1x216x1xf32> to vector<1x216x784xf32>
    %18 = arith.mulf %6, %17 : vector<1x216x784xf32>
    %c0_9 = arith.constant 0 : index
    %c0_10 = arith.constant 0 : index
    %c0_11 = arith.constant 0 : index
    %19 = vector.load %arg3[%c0_9, %c0_10, %c0_11] : memref<1x216x1xf32, #tpu.memory_space<vmem>>, vector<1x216x1xf32>
    %20 = vector.broadcast %19 : vector<1x216x1xf32> to vector<1x216x784xf32>
    %21 = arith.addf %18, %20 : vector<1x216x784xf32>
    %c0_12 = arith.constant 0 : index
    %c0_13 = arith.constant 0 : index
    %c0_14 = arith.constant 0 : index
    %22 = vector.load %arg4[%c0_12, %c0_13, %c0_14] : memref<1x216x784xf32, #tpu.memory_space<vmem>>, vector<1x216x784xf32>
    tpu.vector_store %arg4[%c0_12, %c0_13, %c0_14], %21 {strides = array<i32>} : memref<1x216x784xf32, #tpu.memory_space<vmem>>, vector<1x216x784xf32>,
    return
  }
  func.func @transform_0(%arg0: i32) -> (i32, i32, i32) {
    %c0_i32 = arith.constant 0 : i32
    %c0_i32_0 = arith.constant 0 : i32
    %c0_i32_1 = arith.constant 0 : i32
    return %c0_i32, %arg0, %c0_i32_0 : i32, i32, i32
  }
  func.func @transform_1(%arg0: i32) -> (i32, i32, i32) {
    %c0_i32 = arith.constant 0 : i32
    %c0_i32_0 = arith.constant 0 : i32
    %c0_i32_1 = arith.constant 0 : i32
    return %c0_i32, %arg0, %c0_i32_0 : i32, i32, i32
  }
  func.func @transform_2(%arg0: i32) -> (i32, i32, i32) {
    %c0_i32 = arith.constant 0 : i32
    %c0_i32_0 = arith.constant 0 : i32
    %c0_i32_1 = arith.constant 0 : i32
    return %c0_i32, %arg0, %c0_i32_0 : i32, i32, i32
  }
  func.func @transform_3(%arg0: i32) -> (i32, i32, i32) {
    %c0_i32 = arith.constant 0 : i32
    %c0_i32_0 = arith.constant 0 : i32
    %c0_i32_1 = arith.constant 0 : i32
    return %c0_i32, %arg0, %c0_i32_0 : i32, i32, i32
  }
}

</mosaic_0001>

<llo_original>
// kernel: tpu_custom_call.1
$region0: #{tpu_custom_call.1}
  #allocation0 [shape = 'u32[]', space=smem, size = 0x4, offset = 0x4, fixed_abs, tag = 'smem constant byte address 0x4 - core index']
  #allocation1 [shape = 'u32[144,128]{1,0:T(1,128)}', space=vmem, size = 0x12000, scoped, tag = 'internal scratch']
  %s0 = inlined_call_operand.hbm [shape: f32[1,432,784], index: 0, kind: input, shape index: {}]
  %s1 = inlined_call_operand.vmem [shape: f32[1,432,1], index: 1, kind: input, shape index: {}]
  %s2 = inlined_call_operand.vmem [shape: f32[1,432,1], index: 2, kind: input, shape index: {}]
  %s3 = inlined_call_operand.hbm [shape: f32[1,432,784], index: 3, kind: output, shape index: {}]
  %s4 = sld [smem:[#allocation0]]
  $region49: #{tpu_custom_call.1} parent=0
    _
  %s6 = ssub.s32 1, %s4
  %s7 = scalar_select 0, %s6, %s4
  $region1: #{tpu_custom_call.1} parent=0
    #allocation2 [shape = 'u8[1548288]{0}', space=vmem, size = 0x17a000, scoped, tag = 'input window, operand 0']
    #allocation3 [shape = 's32[2]{0}', space=sflag, size = 0x8, scoped, tag = 'scoped memory for tpu_custom_call.1']
    #allocation4 [shape = 's32[2]{0}', space=sflag, size = 0x8, scoped, tag = 'scoped memory for tpu_custom_call.1']
    #allocation5 [shape = 'u8[1548288]{0}', space=vmem, size = 0x17a000, scoped, tag = 'output window, operand 0']
    %8 = vsyncpa [#allocation3], 0
    %s9 = scalar_lea.sflag [#allocation3], 1
    %10 = vsyncpa %s9, 0
    %11 = vsyncpa [#allocation4], 0
    %s12 = scalar_lea.sflag [#allocation4], 1
    %13 = vsyncpa %s12, 0
    loop: start=0, step=1, limit=4
    $region2: #{tpu_custom_call.1} parent=1 // loop_pre_header
      _
    $region3: #{tpu_custom_call.1} parent=1 // loop_header
      %s15 = sphi 0, %s19
      %p16 = scmp.ge.s32.totalorder %s15, 4
      %s25 = sphi 0, %s27
      %s28 = sphi 0, %s25
      %s29 = sphi 0, %s28
      %s45 = sphi 0, %s29
      %s51 = sphi 0, %s53
      %s54 = sphi 0, %s51
      %s55 = sphi 0, %s54
      %s71 = sphi 0, %s55
      %s77 = sphi 0, %s79
      %s80 = sphi 0, %s77
      %s81 = sphi 0, %s80
      %s97 = sphi 0, %s81
      %s103 = sphi 0, %s105
      %s106 = sphi 0, %s103
      %s107 = sphi 0, %s106
      %s123 = sphi 0, %s107
    $region4: #{tpu_custom_call.1} parent=1 // loop_header_branch
      %18 = sbr.rel (%p16) target = $region8
    $region5: #{tpu_custom_call.1} parent=1 // loop_body
      %s20 = ssub.s32 %s15, 1
      %s21 = ssub.s32 %s15, 2
      %s22 = sadd.s32 %s15, 1
      %s23 = ssub.s32 %s15, %s22
      %p24 = scmp.eq.s32.totalorder %s23, 0
      %s26 = sadd.s32 %s25, 1
      %s27 = scalar_select %p24, %s25, %s26
      %p30 = pneg %p24
      %p31 = scmp.eq.s32.totalorder %s15, 1
      %p32 = por %p30, %p31
      %p33 = scmp.ne.s32.totalorder %s25, %s28
      %p34 = scmp.eq.s32.totalorder %s15, 0
      %p35 = por %p33, %p34
      %p36 = scmp.ne.s32.totalorder %s25, %s28
      %p37 = scmp.eq.s32.totalorder %s20, 1
      %p38 = por %p36, %p37
      %p39 = scmp.ne.s32.totalorder %s28, %s29
      %p40 = scmp.eq.s32.totalorder %s20, 0
      %p41 = por %p39, %p40
      %p42 = scmp.ne.s32.totalorder %s28, %s29
      %p43 = scmp.eq.s32.totalorder %s21, 1
      %p44 = por %p42, %p43
      %p46 = scmp.ne.s32.totalorder %s29, %s45
      %p47 = scmp.eq.s32.totalorder %s21, 0
      %p48 = por %p46, %p47
      %s49 = ssub.s32 %s15, %s22
      %p50 = scmp.eq.s32.totalorder %s49, 0
      %s52 = sadd.s32 %s51, 1
      %s53 = scalar_select %p50, %s51, %s52
      %p56 = pneg %p50
      %p57 = scmp.eq.s32.totalorder %s15, 1
      %p58 = por %p56, %p57
      %p59 = scmp.ne.s32.totalorder %s51, %s54
      %p60 = scmp.eq.s32.totalorder %s15, 0
      %p61 = por %p59, %p60
      %p62 = scmp.ne.s32.totalorder %s51, %s54
      %p63 = scmp.eq.s32.totalorder %s20, 1
      %p64 = por %p62, %p63
      %p65 = scmp.ne.s32.totalorder %s54, %s55
      %p66 = scmp.eq.s32.totalorder %s20, 0
      %p67 = por %p65, %p66
      %p68 = scmp.ne.s32.totalorder %s54, %s55
      %p69 = scmp.eq.s32.totalorder %s21, 1
      %p70 = por %p68, %p69
      %p72 = scmp.ne.s32.totalorder %s55, %s71
      %p73 = scmp.eq.s32.totalorder %s21, 0
      %p74 = por %p72, %p73
      %s75 = ssub.s32 %s15, %s22
      %p76 = scmp.eq.s32.totalorder %s75, 0
      %s78 = sadd.s32 %s77, 1
      %s79 = scalar_select %p76, %s77, %s78
      %p82 = pneg %p76
      %p83 = scmp.eq.s32.totalorder %s15, 1
      %p84 = por %p82, %p83
      %p85 = scmp.ne.s32.totalorder %s77, %s80
      %p86 = scmp.eq.s32.totalorder %s15, 0
      %p87 = por %p85, %p86
      %p88 = scmp.ne.s32.totalorder %s77, %s80
      %p89 = scmp.eq.s32.totalorder %s20, 1
      %p90 = por %p88, %p89
      %p91 = scmp.ne.s32.totalorder %s80, %s81
      %p92 = scmp.eq.s32.totalorder %s20, 0
      %p93 = por %p91, %p92
      %p94 = scmp.ne.s32.totalorder %s80, %s81
      %p95 = scmp.eq.s32.totalorder %s21, 1
      %p96 = por %p94, %p95
      %p98 = scmp.ne.s32.totalorder %s81, %s97
      %p99 = scmp.eq.s32.totalorder %s21, 0
      %p100 = por %p98, %p99
      %s101 = ssub.s32 %s15, %s22
      %p102 = scmp.eq.s32.totalorder %s101, 0
      %s104 = sadd.s32 %s103, 1
      %s105 = scalar_select %p102, %s103, %s104
      %p108 = pneg %p102
      %p109 = scmp.eq.s32.totalorder %s15, 1
      %p110 = por %p108, %p109
      %p111 = scmp.ne.s32.totalorder %s103, %s106
      %p112 = scmp.eq.s32.totalorder %s15, 0
      %p113 = por %p111, %p112
      %p114 = scmp.ne.s32.totalorder %s103, %s106
      %p115 = scmp.eq.s32.totalorder %s20, 1
      %p116 = por %p114, %p115
      %p117 = scmp.ne.s32.totalorder %s106, %s107
      %p118 = scmp.eq.s32.totalorder %s20, 0
      %p119 = por %p117, %p118
      %p120 = scmp.ne.s32.totalorder %s106, %s107
      %p121 = scmp.eq.s32.totalorder %s21, 1
      %p122 = por %p120, %p121
      %p124 = scmp.ne.s32.totalorder %s107, %s123
      %p125 = scmp.eq.s32.totalorder %s21, 0
      %p126 = por %p124, %p125
      %p127 = scmp.le.s32.totalorder 1, %s15
      %p128 = scmp.lt.s32.totalorder %s15, 3
      %p129 = pnand %p127, %p128
      %p130 = pneg %p129
      // Predicated region
      $region9: #{tpu_custom_call.1} parent=5 // pred_check
        _
      $region10: #{tpu_custom_call.1} parent=5 // pred_check_branch
        %132 = sbr.rel (%p129) target = $region12
      $region11: #{tpu_custom_call.1} parent=5 // pred_region
        %s133 = ssub.s32 %s15, 1
      $region12: #{tpu_custom_call.1} parent=5 // pred_fallthru
        _
      %p134 = scmp.lt.s32.totalorder %s15, 2
      // Predicated region
      $region13: #{tpu_custom_call.1} parent=5 // pred_check
        %p135 = pneg %p134
      $region14: #{tpu_custom_call.1} parent=5 // pred_check_branch
        %137 = sbr.rel (%p135) target = $region16
      $region15: #{tpu_custom_call.1} parent=5 // pred_region
        // Predicated region
        $region17: #{tpu_custom_call.1} parent=15 // pred_check
          %p138 = pneg %p35
        $region18: #{tpu_custom_call.1} parent=15 // pred_check_branch
          %140 = sbr.rel (%p138) target = $region20
        $region19: #{tpu_custom_call.1} parent=15 // pred_region
          %s141 = sand.u32 %s25, 1
          %s142 = scalar_lea.sflag [#allocation3], %s141
          %s143 = sand.u32 %s25, 1
          %s144 = smul.addr %s143, 1512
          %s145 = scalar_lea.vmem [#allocation2], %s144
          %s146 = smul.u32 27, %s15
          %s148 = ssub.s32 24192, 24192
          %149 = vsyncadd %s142, %s148
          %s150 = smul.addr %s146, 7
          %s151 = smul.addr %s150, 128
          %s152 = scalar_lea.hbm %s0, %s151
          %s153 = sshll.u32 %s145, 4
          %s154 = int_to_ptr.vmem [resolvable:$true] %s153
          %159 = dma.hbm_to_vmem [thread:$0]  %s152, 24192, %s154, %s142, 896, 896, 56
        $region20: #{tpu_custom_call.1} parent=15 // pred_fallthru
          _
        // Predicated region
        $region21: #{tpu_custom_call.1} parent=15 // pred_check
          %p160 = pneg %p61
        $region22: #{tpu_custom_call.1} parent=15 // pred_check_branch
          %162 = sbr.rel (%p160) target = $region24
        $region23: #{tpu_custom_call.1} parent=15 // pred_region
          %s163 = smul.u32 27, %s15
          %p164 = scmp.lt.s32.totalorder %s163, 53
          %s165 = scalar_select %p164, %s163, 53
          %s166 = smul.addr %s165, 8
          %s167 = scalar_lea.vmem %s1, %s166
          %s168 = smul.u32 27, %s15
        $region24: #{tpu_custom_call.1} parent=15 // pred_fallthru
          _
        // Predicated region
        $region25: #{tpu_custom_call.1} parent=15 // pred_check
          %p169 = pneg %p87
        $region26: #{tpu_custom_call.1} parent=15 // pred_check_branch
          %171 = sbr.rel (%p169) target = $region28
        $region27: #{tpu_custom_call.1} parent=15 // pred_region
          %s172 = smul.u32 27, %s15
          %p173 = scmp.lt.s32.totalorder %s172, 53
          %s174 = scalar_select %p173, %s172, 53
          %s175 = smul.addr %s174, 8
          %s176 = scalar_lea.vmem %s2, %s175
          %s177 = smul.u32 27, %s15
        $region28: #{tpu_custom_call.1} parent=15 // pred_fallthru
          _
      $region16: #{tpu_custom_call.1} parent=5 // pred_fallthru
        _
      %p178 = scmp.le.s32.totalorder 1, %s15
      %p179 = scmp.lt.s32.totalorder %s15, 3
      %p180 = pnand %p178, %p179
      %p181 = pneg %p180
      // Predicated region
      $region29: #{tpu_custom_call.1} parent=5 // pred_check
        _
      $region30: #{tpu_custom_call.1} parent=5 // pred_check_branch
        %183 = sbr.rel (%p180) target = $region32
      $region31: #{tpu_custom_call.1} parent=5 // pred_region
        %s184 = ssub.s32 %s15, 1
        %s185 = sand.u32 %s28, 1
        %s186 = scalar_lea.sflag [#allocation3], %s185
        %s187 = sand.u32 %s28, 1
        %s188 = smul.addr %s187, 1512
        %s189 = scalar_lea.vmem [#allocation2], %s188
        // Predicated region
        $region33: #{tpu_custom_call.1} parent=31 // pred_check
          %p190 = pneg %p41
        $region34: #{tpu_custom_call.1} parent=31 // pred_check_branch
          %192 = sbr.rel (%p190) target = $region36
        $region35: #{tpu_custom_call.1} parent=31 // pred_region
          %193 = dma.done %s186, 24192
        $region36: #{tpu_custom_call.1} parent=31 // pred_fallthru
          _
        %s194 = sand.u32 %s28, 1
        %s195 = scalar_lea.sflag [#allocation3], %s194
        %s196 = sand.u32 %s28, 1
        %s197 = smul.addr %s196, 1512
        %s198 = scalar_lea.vmem [#allocation2], %s197
        %p199 = pneg %p41
        %p200 = pneg %p38
        %s201 = smul.u32 27, %s20
        %p202 = scmp.lt.s32.totalorder %s201, 53
        %s203 = scalar_select %p202, %s201, 53
        %s204 = smul.addr %s203, 8
        %s205 = scalar_lea.vmem %s1, %s204
        %p206 = pneg %p67
        %p207 = pneg %p64
        %s208 = smul.u32 27, %s20
        %p209 = scmp.lt.s32.totalorder %s208, 53
        %s210 = scalar_select %p209, %s208, 53
        %s211 = smul.addr %s210, 8
        %s212 = scalar_lea.vmem %s2, %s211
        %p213 = pneg %p93
        %p214 = pneg %p90
        %p215 = pneg %p119
        %p216 = pneg %p116
        %s217 = sand.u32 %s106, 1
        %s218 = scalar_lea.sflag [#allocation4], %s217
        %s219 = sand.u32 %s106, 1
        %s220 = smul.addr %s219, 1512
        %s221 = scalar_lea.vmem [#allocation5], %s220
        %s222 = smul.u32 27, %s20
        %s223 = smul.u32 27, %s20
        %p224 = scmp.lt.s32.totalorder %s223, 53
        %s225 = scalar_select %p224, %s223, 53
        %s226 = smul.addr %s225, 8
        %s227 = scalar_lea.vmem %s1, %s226
        %s228 = smul.u32 27, %s20
        %s229 = smul.u32 27, %s20
        %p230 = scmp.lt.s32.totalorder %s229, 53
        %s231 = scalar_select %p230, %s229, 53
        %s232 = smul.addr %s231, 8
        %s233 = scalar_lea.vmem %s2, %s232
        %s234 = smul.u32 27, %s20
        %s235 = smul.u32 27, %s20
        %v236 = vld [vmem:[%s189] sm:$0xff]
        %v237 = vld [vmem:[%s189 + $0x8] sm:$0xff]
        %v238 = vld [vmem:[%s189 + $0x10] sm:$0xff]
        %v239 = vld [vmem:[%s189 + $0x18] sm:$0xff]
        %v240 = vld [vmem:[%s189 + $0x20] sm:$0xff]
        %v241 = vld [vmem:[%s189 + $0x28] sm:$0xff]
        %v242 = vld [vmem:[%s189 + $0x30] sm:$0xff]
        %v243 = vld [vmem:[%s189 + $0x38] sm:$0xff]
        %v244 = vld [vmem:[%s189 + $0x40] sm:$0xff]
        %v245 = vld [vmem:[%s189 + $0x48] sm:$0xff]
        %v246 = vld [vmem:[%s189 + $0x50] sm:$0xff]
        %v247 = vld [vmem:[%s189 + $0x58] sm:$0xff]
        %v248 = vld [vmem:[%s189 + $0x60] sm:$0xff]
        %v249 = vld [vmem:[%s189 + $0x68] sm:$0xff]
        %v250 = vld [vmem:[%s189 + $0x70] sm:$0xff]
        %v251 = vld [vmem:[%s189 + $0x78] sm:$0xff]
        %v252 = vld [vmem:[%s189 + $0x80] sm:$0xff]
        %v253 = vld [vmem:[%s189 + $0x88] sm:$0xff]
        %v254 = vld [vmem:[%s189 + $0x90] sm:$0xff]
        %v255 = vld [vmem:[%s189 + $0x98] sm:$0xff]
        %v256 = vld [vmem:[%s189 + $0xa0] sm:$0xff]
        %v257 = vld [vmem:[%s189 + $0xa8] sm:$0xff]
        %v258 = vld [vmem:[%s189 + $0xb0] sm:$0xff]
        %v259 = vld [vmem:[%s189 + $0xb8] sm:$0xff]
        %v260 = vld [vmem:[%s189 + $0xc0] sm:$0xff]
        %v261 = vld [vmem:[%s189 + $0xc8] sm:$0xff]
        %v262 = vld [vmem:[%s189 + $0xd0] sm:$0xff]
        %v263 = vld [vmem:[%s189 + $0xd8] sm:$0xff]
        %v264 = vld [vmem:[%s189 + $0xe0] sm:$0xff]
        %v265 = vld [vmem:[%s189 + $0xe8] sm:$0xff]
        %v266 = vld [vmem:[%s189 + $0xf0] sm:$0xff]
        %v267 = vld [vmem:[%s189 + $0xf8] sm:$0xff]
        %v268 = vld [vmem:[%s189 + $0x100] sm:$0xff]
        %v269 = vld [vmem:[%s189 + $0x108] sm:$0xff]
        %v270 = vld [vmem:[%s189 + $0x110] sm:$0xff]
        %v271 = vld [vmem:[%s189 + $0x118] sm:$0xff]
        %v272 = vld [vmem:[%s189 + $0x120] sm:$0xff]
        %v273 = vld [vmem:[%s189 + $0x128] sm:$0xff]
        %v274 = vld [vmem:[%s189 + $0x130] sm:$0xff]
        %v275 = vld [vmem:[%s189 + $0x138] sm:$0xff]
        %v276 = vld [vmem:[%s189 + $0x140] sm:$0xff]
        %v277 = vld [vmem:[%s189 + $0x148] sm:$0xff]
        %v278 = vld [vmem:[%s189 + $0x150] sm:$0xff]
        %v279 = vld [vmem:[%s189 + $0x158] sm:$0xff]
        %v280 = vld [vmem:[%s189 + $0x160] sm:$0xff]
        %v281 = vld [vmem:[%s189 + $0x168] sm:$0xff]
        %v282 = vld [vmem:[%s189 + $0x170] sm:$0xff]
        %v283 = vld [vmem:[%s189 + $0x178] sm:$0xff]
        %v284 = vld [vmem:[%s189 + $0x180] sm:$0xff]
        %v285 = vld [vmem:[%s189 + $0x188] sm:$0xff]
        %v286 = vld [vmem:[%s189 + $0x190] sm:$0xff]
        %v287 = vld [vmem:[%s189 + $0x198] sm:$0xff]
        %v288 = vld [vmem:[%s189 + $0x1a0] sm:$0xff]
        %v289 = vld [vmem:[%s189 + $0x1a8] sm:$0xff]
        %v290 = vld [vmem:[%s189 + $0x1b0] sm:$0xff]
        %v291 = vld [vmem:[%s189 + $0x1b8] sm:$0xff]
        %v292 = vld [vmem:[%s189 + $0x1c0] sm:$0xff]
        %v293 = vld [vmem:[%s189 + $0x1c8] sm:$0xff]
        %v294 = vld [vmem:[%s189 + $0x1d0] sm:$0xff]
        %v295 = vld [vmem:[%s189 + $0x1d8] sm:$0xff]
        %v296 = vld [vmem:[%s189 + $0x1e0] sm:$0xff]
        %v297 = vld [vmem:[%s189 + $0x1e8] sm:$0xff]
        %v298 = vld [vmem:[%s189 + $0x1f0] sm:$0xff]
        %v299 = vld [vmem:[%s189 + $0x1f8] sm:$0xff]
        %v300 = vld [vmem:[%s189 + $0x200] sm:$0xff]
        %v301 = vld [vmem:[%s189 + $0x208] sm:$0xff]
        %v302 = vld [vmem:[%s189 + $0x210] sm:$0xff]
        %v303 = vld [vmem:[%s189 + $0x218] sm:$0xff]
        %v304 = vld [vmem:[%s189 + $0x220] sm:$0xff]
        %v305 = vld [vmem:[%s189 + $0x228] sm:$0xff]
        %v306 = vld [vmem:[%s189 + $0x230] sm:$0xff]
        %v307 = vld [vmem:[%s189 + $0x238] sm:$0xff]
        %v308 = vld [vmem:[%s189 + $0x240] sm:$0xff]
        %v309 = vld [vmem:[%s189 + $0x248] sm:$0xff]
        %v310 = vld [vmem:[%s189 + $0x250] sm:$0xff]
        %v311 = vld [vmem:[%s189 + $0x258] sm:$0xff]
        %v312 = vld [vmem:[%s189 + $0x260] sm:$0xff]
        %v313 = vld [vmem:[%s189 + $0x268] sm:$0xff]
        %v314 = vld [vmem:[%s189 + $0x270] sm:$0xff]
        %v315 = vld [vmem:[%s189 + $0x278] sm:$0xff]
        %v316 = vld [vmem:[%s189 + $0x280] sm:$0xff]
        %v317 = vld [vmem:[%s189 + $0x288] sm:$0xff]
        %v318 = vld [vmem:[%s189 + $0x290] sm:$0xff]
        %v319 = vld [vmem:[%s189 + $0x298] sm:$0xff]
        %v320 = vld [vmem:[%s189 + $0x2a0] sm:$0xff]
        %v321 = vld [vmem:[%s189 + $0x2a8] sm:$0xff]
        %v322 = vld [vmem:[%s189 + $0x2b0] sm:$0xff]
        %v323 = vld [vmem:[%s189 + $0x2b8] sm:$0xff]
        %v324 = vld [vmem:[%s189 + $0x2c0] sm:$0xff]
        %v325 = vld [vmem:[%s189 + $0x2c8] sm:$0xff]
        %v326 = vld [vmem:[%s189 + $0x2d0] sm:$0xff]
        %v327 = vld [vmem:[%s189 + $0x2d8] sm:$0xff]
        %v328 = vld [vmem:[%s189 + $0x2e0] sm:$0xff]
        %v329 = vld [vmem:[%s189 + $0x2e8] sm:$0xff]
        %v330 = vld [vmem:[%s189 + $0x2f0] sm:$0xff]
        %v331 = vld [vmem:[%s189 + $0x2f8] sm:$0xff]
        %v332 = vld [vmem:[%s189 + $0x300] sm:$0xff]
        %v333 = vld [vmem:[%s189 + $0x308] sm:$0xff]
        %v334 = vld [vmem:[%s189 + $0x310] sm:$0xff]
        %v335 = vld [vmem:[%s189 + $0x318] sm:$0xff]
        %v336 = vld [vmem:[%s189 + $0x320] sm:$0xff]
        %v337 = vld [vmem:[%s189 + $0x328] sm:$0xff]
        %v338 = vld [vmem:[%s189 + $0x330] sm:$0xff]
        %v339 = vld [vmem:[%s189 + $0x338] sm:$0xff]
        %v340 = vld [vmem:[%s189 + $0x340] sm:$0xff]
        %v341 = vld [vmem:[%s189 + $0x348] sm:$0xff]
        %v342 = vld [vmem:[%s189 + $0x350] sm:$0xff]
        %v343 = vld [vmem:[%s189 + $0x358] sm:$0xff]
        %v344 = vld [vmem:[%s189 + $0x360] sm:$0xff]
        %v345 = vld [vmem:[%s189 + $0x368] sm:$0xff]
        %v346 = vld [vmem:[%s189 + $0x370] sm:$0xff]
        %v347 = vld [vmem:[%s189 + $0x378] sm:$0xff]
        %v348 = vld [vmem:[%s189 + $0x380] sm:$0xff]
        %v349 = vld [vmem:[%s189 + $0x388] sm:$0xff]
        %v350 = vld [vmem:[%s189 + $0x390] sm:$0xff]
        %v351 = vld [vmem:[%s189 + $0x398] sm:$0xff]
        %v352 = vld [vmem:[%s189 + $0x3a0] sm:$0xff]
        %v353 = vld [vmem:[%s189 + $0x3a8] sm:$0xff]
        %v354 = vld [vmem:[%s189 + $0x3b0] sm:$0xff]
        %v355 = vld [vmem:[%s189 + $0x3b8] sm:$0xff]
        %v356 = vld [vmem:[%s189 + $0x3c0] sm:$0xff]
        %v357 = vld [vmem:[%s189 + $0x3c8] sm:$0xff]
        %v358 = vld [vmem:[%s189 + $0x3d0] sm:$0xff]
        %v359 = vld [vmem:[%s189 + $0x3d8] sm:$0xff]
        %v360 = vld [vmem:[%s189 + $0x3e0] sm:$0xff]
        %v361 = vld [vmem:[%s189 + $0x3e8] sm:$0xff]
        %v362 = vld [vmem:[%s189 + $0x3f0] sm:$0xff]
        %v363 = vld [vmem:[%s189 + $0x3f8] sm:$0xff]
        %v364 = vld [vmem:[%s189 + $0x400] sm:$0xff]
        %v365 = vld [vmem:[%s189 + $0x408] sm:$0xff]
        %v366 = vld [vmem:[%s189 + $0x410] sm:$0xff]
        %v367 = vld [vmem:[%s189 + $0x418] sm:$0xff]
        %v368 = vld [vmem:[%s189 + $0x420] sm:$0xff]
        %v369 = vld [vmem:[%s189 + $0x428] sm:$0xff]
        %v370 = vld [vmem:[%s189 + $0x430] sm:$0xff]
        %v371 = vld [vmem:[%s189 + $0x438] sm:$0xff]
        %v372 = vld [vmem:[%s189 + $0x440] sm:$0xff]
        %v373 = vld [vmem:[%s189 + $0x448] sm:$0xff]
        %v374 = vld [vmem:[%s189 + $0x450] sm:$0xff]
        %v375 = vld [vmem:[%s189 + $0x458] sm:$0xff]
        %v376 = vld [vmem:[%s189 + $0x460] sm:$0xff]
        %v377 = vld [vmem:[%s189 + $0x468] sm:$0xff]
        %v378 = vld [vmem:[%s189 + $0x470] sm:$0xff]
        %v379 = vld [vmem:[%s189 + $0x478] sm:$0xff]
        %v380 = vld [vmem:[%s189 + $0x480] sm:$0xff]
        %v381 = vld [vmem:[%s189 + $0x488] sm:$0xff]
        %v382 = vld [vmem:[%s189 + $0x490] sm:$0xff]
        %v383 = vld [vmem:[%s189 + $0x498] sm:$0xff]
        %v384 = vld [vmem:[%s189 + $0x4a0] sm:$0xff]
        %v385 = vld [vmem:[%s189 + $0x4a8] sm:$0xff]
        %v386 = vld [vmem:[%s189 + $0x4b0] sm:$0xff]
        %v387 = vld [vmem:[%s189 + $0x4b8] sm:$0xff]
        %v388 = vld [vmem:[%s189 + $0x4c0] sm:$0xff]
        %v389 = vld [vmem:[%s189 + $0x4c8] sm:$0xff]
        %v390 = vld [vmem:[%s189 + $0x4d0] sm:$0xff]
        %v391 = vld [vmem:[%s189 + $0x4d8] sm:$0xff]
        %v392 = vld [vmem:[%s189 + $0x4e0] sm:$0xff]
        %v393 = vld [vmem:[%s189 + $0x4e8] sm:$0xff]
        %v394 = vld [vmem:[%s189 + $0x4f0] sm:$0xff]
        %v395 = vld [vmem:[%s189 + $0x4f8] sm:$0xff]
        %v396 = vld [vmem:[%s189 + $0x500] sm:$0xff]
        %v397 = vld [vmem:[%s189 + $0x508] sm:$0xff]
        %v398 = vld [vmem:[%s189 + $0x510] sm:$0xff]
        %v399 = vld [vmem:[%s189 + $0x518] sm:$0xff]
        %v400 = vld [vmem:[%s189 + $0x520] sm:$0xff]
        %v401 = vld [vmem:[%s189 + $0x528] sm:$0xff]
        %v402 = vld [vmem:[%s189 + $0x530] sm:$0xff]
        %v403 = vld [vmem:[%s189 + $0x538] sm:$0xff]
        %v404 = vld [vmem:[%s189 + $0x540] sm:$0xff]
        %v405 = vld [vmem:[%s189 + $0x548] sm:$0xff]
        %v406 = vld [vmem:[%s189 + $0x550] sm:$0xff]
        %v407 = vld [vmem:[%s189 + $0x558] sm:$0xff]
        %v408 = vld [vmem:[%s189 + $0x560] sm:$0xff]
        %v409 = vld [vmem:[%s189 + $0x568] sm:$0xff]
        %v410 = vld [vmem:[%s189 + $0x570] sm:$0xff]
        %v411 = vld [vmem:[%s189 + $0x578] sm:$0xff]
        %v412 = vld [vmem:[%s189 + $0x580] sm:$0xff]
        %v413 = vld [vmem:[%s189 + $0x588] sm:$0xff]
        %v414 = vld [vmem:[%s189 + $0x590] sm:$0xff]
        %v415 = vld [vmem:[%s189 + $0x598] sm:$0xff]
        %v416 = vld [vmem:[%s189 + $0x5a0] sm:$0xff]
        %v417 = vld [vmem:[%s189 + $0x5a8] sm:$0xff]
        %v418 = vld [vmem:[%s189 + $0x5b0] sm:$0xff]
        %v419 = vld [vmem:[%s189 + $0x5b8] sm:$0xff]
        %v420 = vld [vmem:[%s189 + $0x5c0] sm:$0xff]
        %v421 = vld [vmem:[%s189 + $0x5c8] sm:$0xff]
        %v422 = vld [vmem:[%s189 + $0x5d0] sm:$0xff]
        %v423 = vld [vmem:[%s189 + $0x5d8] sm:$0xff]
        %v424 = vld [vmem:[%s189 + $0x5e0] sm:$0xff]
        %v425 = vadd.f32 %v236, %v237
        %v426 = vadd.f32 %v425, %v238
        %v427 = vadd.f32 %v426, %v239
        %v428 = vadd.f32 %v427, %v240
        %v429 = vadd.f32 %v428, %v241
        %vm430 = vcmask 130048
        %v431 = vsel %vm430, %v242, 0.0
        %v432 = vadd.f32 %v429, %v431
        %433 = vadd.xlane.f32.xlu0 %v432
        %v434 = vpop.xlane.xlu0 %433
        %v435 = vadd.f32 %v243, %v244
        %v436 = vadd.f32 %v435, %v245
        %v437 = vadd.f32 %v436, %v246
        %v438 = vadd.f32 %v437, %v247
        %v439 = vadd.f32 %v438, %v248
        %v440 = vsel %vm430, %v249, 0.0
        %v441 = vadd.f32 %v439, %v440
        %442 = vadd.xlane.f32.xlu0 %v441
        %v443 = vpop.xlane.xlu0 %442
        %v444 = vadd.f32 %v250, %v251
        %v445 = vadd.f32 %v444, %v252
        %v446 = vadd.f32 %v445, %v253
        %v447 = vadd.f32 %v446, %v254
        %v448 = vadd.f32 %v447, %v255
        %v449 = vsel %vm430, %v256, 0.0
        %v450 = vadd.f32 %v448, %v449
        %451 = vadd.xlane.f32.xlu0 %v450
        %v452 = vpop.xlane.xlu0 %451
        %v453 = vadd.f32 %v257, %v258
        %v454 = vadd.f32 %v453, %v259
        %v455 = vadd.f32 %v454, %v260
        %v456 = vadd.f32 %v455, %v261
        %v457 = vadd.f32 %v456, %v262
        %v458 = vsel %vm430, %v263, 0.0
        %v459 = vadd.f32 %v457, %v458
        %460 = vadd.xlane.f32.xlu0 %v459
        %v461 = vpop.xlane.xlu0 %460
        %v462 = vadd.f32 %v264, %v265
        %v463 = vadd.f32 %v462, %v266
        %v464 = vadd.f32 %v463, %v267
        %v465 = vadd.f32 %v464, %v268
        %v466 = vadd.f32 %v465, %v269
        %v467 = vsel %vm430, %v270, 0.0
        %v468 = vadd.f32 %v466, %v467
        %469 = vadd.xlane.f32.xlu0 %v468
        %v470 = vpop.xlane.xlu0 %469
        %v471 = vadd.f32 %v271, %v272
        %v472 = vadd.f32 %v471, %v273
        %v473 = vadd.f32 %v472, %v274
        %v474 = vadd.f32 %v473, %v275
        %v475 = vadd.f32 %v474, %v276
        %v476 = vsel %vm430, %v277, 0.0
        %v477 = vadd.f32 %v475, %v476
        %478 = vadd.xlane.f32.xlu0 %v477
        %v479 = vpop.xlane.xlu0 %478
        %v480 = vadd.f32 %v278, %v279
        %v481 = vadd.f32 %v480, %v280
        %v482 = vadd.f32 %v481, %v281
        %v483 = vadd.f32 %v482, %v282
        %v484 = vadd.f32 %v483, %v283
        %v485 = vsel %vm430, %v284, 0.0
        %v486 = vadd.f32 %v484, %v485
        %487 = vadd.xlane.f32.xlu0 %v486
        %v488 = vpop.xlane.xlu0 %487
        %v489 = vadd.f32 %v285, %v286
        %v490 = vadd.f32 %v489, %v287
        %v491 = vadd.f32 %v490, %v288
        %v492 = vadd.f32 %v491, %v289
        %v493 = vadd.f32 %v492, %v290
        %v494 = vsel %vm430, %v291, 0.0
        %v495 = vadd.f32 %v493, %v494
        %496 = vadd.xlane.f32.xlu0 %v495
        %v497 = vpop.xlane.xlu0 %496
        %v498 = vadd.f32 %v292, %v293
        %v499 = vadd.f32 %v498, %v294
        %v500 = vadd.f32 %v499, %v295
        %v501 = vadd.f32 %v500, %v296
        %v502 = vadd.f32 %v501, %v297
        %v503 = vsel %vm430, %v298, 0.0
        %v504 = vadd.f32 %v502, %v503
        %505 = vadd.xlane.f32.xlu0 %v504
        %v506 = vpop.xlane.xlu0 %505
        %v507 = vadd.f32 %v299, %v300
        %v508 = vadd.f32 %v507, %v301
        %v509 = vadd.f32 %v508, %v302
        %v510 = vadd.f32 %v509, %v303
        %v511 = vadd.f32 %v510, %v304
        %v512 = vsel %vm430, %v305, 0.0
        %v513 = vadd.f32 %v511, %v512
        %514 = vadd.xlane.f32.xlu0 %v513
        %v515 = vpop.xlane.xlu0 %514
        %v516 = vadd.f32 %v306, %v307
        %v517 = vadd.f32 %v516, %v308
        %v518 = vadd.f32 %v517, %v309
        %v519 = vadd.f32 %v518, %v310
        %v520 = vadd.f32 %v519, %v311
        %v521 = vsel %vm430, %v312, 0.0
        %v522 = vadd.f32 %v520, %v521
        %523 = vadd.xlane.f32.xlu0 %v522
        %v524 = vpop.xlane.xlu0 %523
        %v525 = vadd.f32 %v313, %v314
        %v526 = vadd.f32 %v525, %v315
        %v527 = vadd.f32 %v526, %v316
        %v528 = vadd.f32 %v527, %v317
        %v529 = vadd.f32 %v528, %v318
        %v530 = vsel %vm430, %v319, 0.0
        %v531 = vadd.f32 %v529, %v530
        %532 = vadd.xlane.f32.xlu0 %v531
        %v533 = vpop.xlane.xlu0 %532
        %v534 = vadd.f32 %v320, %v321
        %v535 = vadd.f32 %v534, %v322
        %v536 = vadd.f32 %v535, %v323
        %v537 = vadd.f32 %v536, %v324
        %v538 = vadd.f32 %v537, %v325
        %v539 = vsel %vm430, %v326, 0.0
        %v540 = vadd.f32 %v538, %v539
        %541 = vadd.xlane.f32.xlu0 %v540
        %v542 = vpop.xlane.xlu0 %541
        %v543 = vadd.f32 %v327, %v328
        %v544 = vadd.f32 %v543, %v329
        %v545 = vadd.f32 %v544, %v330
        %v546 = vadd.f32 %v545, %v331
        %v547 = vadd.f32 %v546, %v332
        %v548 = vsel %vm430, %v333, 0.0
        %v549 = vadd.f32 %v547, %v548
        %550 = vadd.xlane.f32.xlu0 %v549
        %v551 = vpop.xlane.xlu0 %550
        %v552 = vadd.f32 %v334, %v335
        %v553 = vadd.f32 %v552, %v336
        %v554 = vadd.f32 %v553, %v337
        %v555 = vadd.f32 %v554, %v338
        %v556 = vadd.f32 %v555, %v339
        %v557 = vsel %vm430, %v340, 0.0
        %v558 = vadd.f32 %v556, %v557
        %559 = vadd.xlane.f32.xlu0 %v558
        %v560 = vpop.xlane.xlu0 %559
        %v561 = vadd.f32 %v341, %v342
        %v562 = vadd.f32 %v561, %v343
        %v563 = vadd.f32 %v562, %v344
        %v564 = vadd.f32 %v563, %v345
        %v565 = vadd.f32 %v564, %v346
        %v566 = vsel %vm430, %v347, 0.0
        %v567 = vadd.f32 %v565, %v566
        %568 = vadd.xlane.f32.xlu0 %v567
        %v569 = vpop.xlane.xlu0 %568
        %v570 = vadd.f32 %v348, %v349
        %v571 = vadd.f32 %v570, %v350
        %v572 = vadd.f32 %v571, %v351
        %v573 = vadd.f32 %v572, %v352
        %v574 = vadd.f32 %v573, %v353
        %v575 = vsel %vm430, %v354, 0.0
        %v576 = vadd.f32 %v574, %v575
        %577 = vadd.xlane.f32.xlu0 %v576
        %v578 = vpop.xlane.xlu0 %577
        %v579 = vadd.f32 %v355, %v356
        %v580 = vadd.f32 %v579, %v357
        %v581 = vadd.f32 %v580, %v358
        %v582 = vadd.f32 %v581, %v359
        %v583 = vadd.f32 %v582, %v360
        %v584 = vsel %vm430, %v361, 0.0
        %v585 = vadd.f32 %v583, %v584
        %586 = vadd.xlane.f32.xlu0 %v585
        %v587 = vpop.xlane.xlu0 %586
        %v588 = vadd.f32 %v362, %v363
        %v589 = vadd.f32 %v588, %v364
        %v590 = vadd.f32 %v589, %v365
        %v591 = vadd.f32 %v590, %v366
        %v592 = vadd.f32 %v591, %v367
        %v593 = vsel %vm430, %v368, 0.0
        %v594 = vadd.f32 %v592, %v593
        %595 = vadd.xlane.f32.xlu0 %v594
        %v596 = vpop.xlane.xlu0 %595
        %v597 = vadd.f32 %v369, %v370
        %v598 = vadd.f32 %v597, %v371
        %v599 = vadd.f32 %v598, %v372
        %v600 = vadd.f32 %v599, %v373
        %v601 = vadd.f32 %v600, %v374
        %v602 = vsel %vm430, %v375, 0.0
        %v603 = vadd.f32 %v601, %v602
        %604 = vadd.xlane.f32.xlu0 %v603
        %v605 = vpop.xlane.xlu0 %604
        %v606 = vadd.f32 %v376, %v377
        %v607 = vadd.f32 %v606, %v378
        %v608 = vadd.f32 %v607, %v379
        %v609 = vadd.f32 %v608, %v380
        %v610 = vadd.f32 %v609, %v381
        %v611 = vsel %vm430, %v382, 0.0
        %v612 = vadd.f32 %v610, %v611
        %613 = vadd.xlane.f32.xlu0 %v612
        %v614 = vpop.xlane.xlu0 %613
        %v615 = vadd.f32 %v383, %v384
        %v616 = vadd.f32 %v615, %v385
        %v617 = vadd.f32 %v616, %v386
        %v618 = vadd.f32 %v617, %v387
        %v619 = vadd.f32 %v618, %v388
        %v620 = vsel %vm430, %v389, 0.0
        %v621 = vadd.f32 %v619, %v620
        %622 = vadd.xlane.f32.xlu0 %v621
        %v623 = vpop.xlane.xlu0 %622
        %v624 = vadd.f32 %v390, %v391
        %v625 = vadd.f32 %v624, %v392
        %v626 = vadd.f32 %v625, %v393
        %v627 = vadd.f32 %v626, %v394
        %v628 = vadd.f32 %v627, %v395
        %v629 = vsel %vm430, %v396, 0.0
        %v630 = vadd.f32 %v628, %v629
        %631 = vadd.xlane.f32.xlu0 %v630
        %v632 = vpop.xlane.xlu0 %631
        %v633 = vadd.f32 %v397, %v398
        %v634 = vadd.f32 %v633, %v399
        %v635 = vadd.f32 %v634, %v400
        %v636 = vadd.f32 %v635, %v401
        %v637 = vadd.f32 %v636, %v402
        %v638 = vsel %vm430, %v403, 0.0
        %v639 = vadd.f32 %v637, %v638
        %640 = vadd.xlane.f32.xlu0 %v639
        %v641 = vpop.xlane.xlu0 %640
        %v642 = vadd.f32 %v404, %v405
        %v643 = vadd.f32 %v642, %v406
        %v644 = vadd.f32 %v643, %v407
        %v645 = vadd.f32 %v644, %v408
        %v646 = vadd.f32 %v645, %v409
        %v647 = vsel %vm430, %v410, 0.0
        %v648 = vadd.f32 %v646, %v647
        %649 = vadd.xlane.f32.xlu0 %v648
        %v650 = vpop.xlane.xlu0 %649
        %v651 = vadd.f32 %v411, %v412
        %v652 = vadd.f32 %v651, %v413
        %v653 = vadd.f32 %v652, %v414
        %v654 = vadd.f32 %v653, %v415
        %v655 = vadd.f32 %v654, %v416
        %v656 = vsel %vm430, %v417, 0.0
        %v657 = vadd.f32 %v655, %v656
        %658 = vadd.xlane.f32.xlu0 %v657
        %v659 = vpop.xlane.xlu0 %658
        %v660 = vadd.f32 %v418, %v419
        %v661 = vadd.f32 %v660, %v420
        %v662 = vadd.f32 %v661, %v421
        %v663 = vadd.f32 %v662, %v422
        %v664 = vadd.f32 %v663, %v423
        %v665 = vsel %vm430, %v424, 0.0
        %v666 = vadd.f32 %v664, %v665
        %667 = vadd.xlane.f32.xlu0 %v666
        %v668 = vpop.xlane.xlu0 %667
        %v669 = vmul.f32 %v434, 0.0012755102
        %v670 = vmul.f32 %v443, 0.0012755102
        %v671 = vmul.f32 %v452, 0.0012755102
        %v672 = vmul.f32 %v461, 0.0012755102
        %v673 = vmul.f32 %v470, 0.0012755102
        %v674 = vmul.f32 %v479, 0.0012755102
        %v675 = vmul.f32 %v488, 0.0012755102
        %v676 = vmul.f32 %v497, 0.0012755102
        %v677 = vmul.f32 %v506, 0.0012755102
        %v678 = vmul.f32 %v515, 0.0012755102
        %v679 = vmul.f32 %v524, 0.0012755102
        %v680 = vmul.f32 %v533, 0.0012755102
        %v681 = vmul.f32 %v542, 0.0012755102
        %v682 = vmul.f32 %v551, 0.0012755102
        %v683 = vmul.f32 %v560, 0.0012755102
        %v684 = vmul.f32 %v569, 0.0012755102
        %v685 = vmul.f32 %v578, 0.0012755102
        %v686 = vmul.f32 %v587, 0.0012755102
        %v687 = vmul.f32 %v596, 0.0012755102
        %v688 = vmul.f32 %v605, 0.0012755102
        %v689 = vmul.f32 %v614, 0.0012755102
        %v690 = vmul.f32 %v623, 0.0012755102
        %v691 = vmul.f32 %v632, 0.0012755102
        %v692 = vmul.f32 %v641, 0.0012755102
        %v693 = vmul.f32 %v650, 0.0012755102
        %v694 = vmul.f32 %v659, 0.0012755102
        %v695 = vmul.f32 %v668, 0.0012755102
        %v696 = vsub.f32 %v236, %v669
        %v697 = vsub.f32 %v237, %v669
        %v698 = vsub.f32 %v238, %v669
        %v699 = vsub.f32 %v239, %v669
        %v700 = vsub.f32 %v240, %v669
        %v701 = vsub.f32 %v241, %v669
        %v702 = vsub.f32 %v242, %v669
        %v703 = vsub.f32 %v243, %v670
        %v704 = vsub.f32 %v244, %v670
        %v705 = vsub.f32 %v245, %v670
        %v706 = vsub.f32 %v246, %v670
        %v707 = vsub.f32 %v247, %v670
        %v708 = vsub.f32 %v248, %v670
        %v709 = vsub.f32 %v249, %v670
        %v710 = vsub.f32 %v250, %v671
        %v711 = vsub.f32 %v251, %v671
        %v712 = vsub.f32 %v252, %v671
        %v713 = vsub.f32 %v253, %v671
        %v714 = vsub.f32 %v254, %v671
        %v715 = vsub.f32 %v255, %v671
        %v716 = vsub.f32 %v256, %v671
        %v717 = vsub.f32 %v257, %v672
        %v718 = vsub.f32 %v258, %v672
        %v719 = vsub.f32 %v259, %v672
        %v720 = vsub.f32 %v260, %v672
        %v721 = vsub.f32 %v261, %v672
        %v722 = vsub.f32 %v262, %v672
        %v723 = vsub.f32 %v263, %v672
        %v724 = vsub.f32 %v264, %v673
        %v725 = vsub.f32 %v265, %v673
        %v726 = vsub.f32 %v266, %v673
        %v727 = vsub.f32 %v267, %v673
        %v728 = vsub.f32 %v268, %v673
        %v729 = vsub.f32 %v269, %v673
        %v730 = vsub.f32 %v270, %v673
        %v731 = vsub.f32 %v271, %v674
        %v732 = vsub.f32 %v272, %v674
        %v733 = vsub.f32 %v273, %v674
        %v734 = vsub.f32 %v274, %v674
        %v735 = vsub.f32 %v275, %v674
        %v736 = vsub.f32 %v276, %v674
        %v737 = vsub.f32 %v277, %v674
        %v738 = vsub.f32 %v278, %v675
        %v739 = vsub.f32 %v279, %v675
        %v740 = vsub.f32 %v280, %v675
        %v741 = vsub.f32 %v281, %v675
        %v742 = vsub.f32 %v282, %v675
        %v743 = vsub.f32 %v283, %v675
        %v744 = vsub.f32 %v284, %v675
        %v745 = vsub.f32 %v285, %v676
        %v746 = vsub.f32 %v286, %v676
        %v747 = vsub.f32 %v287, %v676
        %v748 = vsub.f32 %v288, %v676
        %v749 = vsub.f32 %v289, %v676
        %v750 = vsub.f32 %v290, %v676
        %v751 = vsub.f32 %v291, %v676
        %v752 = vsub.f32 %v292, %v677
        %v753 = vsub.f32 %v293, %v677
        %v754 = vsub.f32 %v294, %v677
        %v755 = vsub.f32 %v295, %v677
        %v756 = vsub.f32 %v296, %v677
        %v757 = vsub.f32 %v297, %v677
        %v758 = vsub.f32 %v298, %v677
        %v759 = vsub.f32 %v299, %v678
        %v760 = vsub.f32 %v300, %v678
        %v761 = vsub.f32 %v301, %v678
        %v762 = vsub.f32 %v302, %v678
        %v763 = vsub.f32 %v303, %v678
        %v764 = vsub.f32 %v304, %v678
        %v765 = vsub.f32 %v305, %v678
        %v766 = vsub.f32 %v306, %v679
        %v767 = vsub.f32 %v307, %v679
        %v768 = vsub.f32 %v308, %v679
        %v769 = vsub.f32 %v309, %v679
        %v770 = vsub.f32 %v310, %v679
        %v771 = vsub.f32 %v311, %v679
        %v772 = vsub.f32 %v312, %v679
        %v773 = vsub.f32 %v313, %v680
        %v774 = vsub.f32 %v314, %v680
        %v775 = vsub.f32 %v315, %v680
        %v776 = vsub.f32 %v316, %v680
        %v777 = vsub.f32 %v317, %v680
        %v778 = vsub.f32 %v318, %v680
        %v779 = vsub.f32 %v319, %v680
        %v780 = vsub.f32 %v320, %v681
        %v781 = vsub.f32 %v321, %v681
        %v782 = vsub.f32 %v322, %v681
        %v783 = vsub.f32 %v323, %v681
        %v784 = vsub.f32 %v324, %v681
        %v785 = vsub.f32 %v325, %v681
        %v786 = vsub.f32 %v326, %v681
        %v787 = vsub.f32 %v327, %v682
        %v788 = vsub.f32 %v328, %v682
        %v789 = vsub.f32 %v329, %v682
        %v790 = vsub.f32 %v330, %v682
        %v791 = vsub.f32 %v331, %v682
        %v792 = vsub.f32 %v332, %v682
        %v793 = vsub.f32 %v333, %v682
        %v794 = vsub.f32 %v334, %v683
        %v795 = vsub.f32 %v335, %v683
        %v796 = vsub.f32 %v336, %v683
        %v797 = vsub.f32 %v337, %v683
        %v798 = vsub.f32 %v338, %v683
        %v799 = vsub.f32 %v339, %v683
        %v800 = vsub.f32 %v340, %v683
        %v801 = vsub.f32 %v341, %v684
        %v802 = vsub.f32 %v342, %v684
        %v803 = vsub.f32 %v343, %v684
        %v804 = vsub.f32 %v344, %v684
        %v805 = vsub.f32 %v345, %v684
        %v806 = vsub.f32 %v346, %v684
        %v807 = vsub.f32 %v347, %v684
        %v808 = vsub.f32 %v348, %v685
        %v809 = vsub.f32 %v349, %v685
        %v810 = vsub.f32 %v350, %v685
        %v811 = vsub.f32 %v351, %v685
        %v812 = vsub.f32 %v352, %v685
        %v813 = vsub.f32 %v353, %v685
        %v814 = vsub.f32 %v354, %v685
        %v815 = vsub.f32 %v355, %v686
        %v816 = vsub.f32 %v356, %v686
        %v817 = vsub.f32 %v357, %v686
        %v818 = vsub.f32 %v358, %v686
        %v819 = vsub.f32 %v359, %v686
        %v820 = vsub.f32 %v360, %v686
        %v821 = vsub.f32 %v361, %v686
        %v822 = vsub.f32 %v362, %v687
        %v823 = vsub.f32 %v363, %v687
        %v824 = vsub.f32 %v364, %v687
        %v825 = vsub.f32 %v365, %v687
        %v826 = vsub.f32 %v366, %v687
        %v827 = vsub.f32 %v367, %v687
        %v828 = vsub.f32 %v368, %v687
        %v829 = vsub.f32 %v369, %v688
        %v830 = vsub.f32 %v370, %v688
        %v831 = vsub.f32 %v371, %v688
        %v832 = vsub.f32 %v372, %v688
        %v833 = vsub.f32 %v373, %v688
        %v834 = vsub.f32 %v374, %v688
        %v835 = vsub.f32 %v375, %v688
        %v836 = vsub.f32 %v376, %v689
        %v837 = vsub.f32 %v377, %v689
        %v838 = vsub.f32 %v378, %v689
        %v839 = vsub.f32 %v379, %v689
        %v840 = vsub.f32 %v380, %v689
        %v841 = vsub.f32 %v381, %v689
        %v842 = vsub.f32 %v382, %v689
        %v843 = vsub.f32 %v383, %v690
        %v844 = vsub.f32 %v384, %v690
        %v845 = vsub.f32 %v385, %v690
        %v846 = vsub.f32 %v386, %v690
        %v847 = vsub.f32 %v387, %v690
        %v848 = vsub.f32 %v388, %v690
        %v849 = vsub.f32 %v389, %v690
        %v850 = vsub.f32 %v390, %v691
        %v851 = vsub.f32 %v391, %v691
        %v852 = vsub.f32 %v392, %v691
        %v853 = vsub.f32 %v393, %v691
        %v854 = vsub.f32 %v394, %v691
        %v855 = vsub.f32 %v395, %v691
        %v856 = vsub.f32 %v396, %v691
        %v857 = vsub.f32 %v397, %v692
        %v858 = vsub.f32 %v398, %v692
        %v859 = vsub.f32 %v399, %v692
        %v860 = vsub.f32 %v400, %v692
        %v861 = vsub.f32 %v401, %v692
        %v862 = vsub.f32 %v402, %v692
        %v863 = vsub.f32 %v403, %v692
        %v864 = vsub.f32 %v404, %v693
        %v865 = vsub.f32 %v405, %v693
        %v866 = vsub.f32 %v406, %v693
        %v867 = vsub.f32 %v407, %v693
        %v868 = vsub.f32 %v408, %v693
        %v869 = vsub.f32 %v409, %v693
        %v870 = vsub.f32 %v410, %v693
        %v871 = vsub.f32 %v411, %v694
        %v872 = vsub.f32 %v412, %v694
        %v873 = vsub.f32 %v413, %v694
        %v874 = vsub.f32 %v414, %v694
        %v875 = vsub.f32 %v415, %v694
        %v876 = vsub.f32 %v416, %v694
        %v877 = vsub.f32 %v417, %v694
        %v878 = vsub.f32 %v418, %v695
        %v879 = vsub.f32 %v419, %v695
        %v880 = vsub.f32 %v420, %v695
        %v881 = vsub.f32 %v421, %v695
        %v882 = vsub.f32 %v422, %v695
        %v883 = vsub.f32 %v423, %v695
        %v884 = vsub.f32 %v424, %v695
        %v885 = vmul.f32 %v696, %v696
        %v886 = vmul.f32 %v697, %v697
        %v887 = vmul.f32 %v698, %v698
        %v888 = vmul.f32 %v699, %v699
        %v889 = vmul.f32 %v700, %v700
        %v890 = vmul.f32 %v701, %v701
        %v891 = vmul.f32 %v702, %v702
        %v892 = vmul.f32 %v703, %v703
        %v893 = vmul.f32 %v704, %v704
        %v894 = vmul.f32 %v705, %v705
        %v895 = vmul.f32 %v706, %v706
        %v896 = vmul.f32 %v707, %v707
        %v897 = vmul.f32 %v708, %v708
        %v898 = vmul.f32 %v709, %v709
        %v899 = vmul.f32 %v710, %v710
        %v900 = vmul.f32 %v711, %v711
        %v901 = vmul.f32 %v712, %v712
        %v902 = vmul.f32 %v713, %v713
        %v903 = vmul.f32 %v714, %v714
        %v904 = vmul.f32 %v715, %v715
        %v905 = vmul.f32 %v716, %v716
        %v906 = vmul.f32 %v717, %v717
        %v907 = vmul.f32 %v718, %v718
        %v908 = vmul.f32 %v719, %v719
        %v909 = vmul.f32 %v720, %v720
        %v910 = vmul.f32 %v721, %v721
        %v911 = vmul.f32 %v722, %v722
        %v912 = vmul.f32 %v723, %v723
        %v913 = vmul.f32 %v724, %v724
        %v914 = vmul.f32 %v725, %v725
        %v915 = vmul.f32 %v726, %v726
        %v916 = vmul.f32 %v727, %v727
        %v917 = vmul.f32 %v728, %v728
        %v918 = vmul.f32 %v729, %v729
        %v919 = vmul.f32 %v730, %v730
        %v920 = vmul.f32 %v731, %v731
        %v921 = vmul.f32 %v732, %v732
        %v922 = vmul.f32 %v733, %v733
        %v923 = vmul.f32 %v734, %v734
        %v924 = vmul.f32 %v735, %v735
        %v925 = vmul.f32 %v736, %v736
        %v926 = vmul.f32 %v737, %v737
        %v927 = vmul.f32 %v738, %v738
        %v928 = vmul.f32 %v739, %v739
        %v929 = vmul.f32 %v740, %v740
        %v930 = vmul.f32 %v741, %v741
        %v931 = vmul.f32 %v742, %v742
        %v932 = vmul.f32 %v743, %v743
        %v933 = vmul.f32 %v744, %v744
        %v934 = vmul.f32 %v745, %v745
        %v935 = vmul.f32 %v746, %v746
        %v936 = vmul.f32 %v747, %v747
        %v937 = vmul.f32 %v748, %v748
        %v938 = vmul.f32 %v749, %v749
        %v939 = vmul.f32 %v750, %v750
        %v940 = vmul.f32 %v751, %v751
        %v941 = vmul.f32 %v752, %v752
        %v942 = vmul.f32 %v753, %v753
        %v943 = vmul.f32 %v754, %v754
        %v944 = vmul.f32 %v755, %v755
        %v945 = vmul.f32 %v756, %v756
        %v946 = vmul.f32 %v757, %v757
        %v947 = vmul.f32 %v758, %v758
        %v948 = vmul.f32 %v759, %v759
        %v949 = vmul.f32 %v760, %v760
        %v950 = vmul.f32 %v761, %v761
        %v951 = vmul.f32 %v762, %v762
        %v952 = vmul.f32 %v763, %v763
        %v953 = vmul.f32 %v764, %v764
        %v954 = vmul.f32 %v765, %v765
        %v955 = vmul.f32 %v766, %v766
        %v956 = vmul.f32 %v767, %v767
        %v957 = vmul.f32 %v768, %v768
        %v958 = vmul.f32 %v769, %v769
        %v959 = vmul.f32 %v770, %v770
        %v960 = vmul.f32 %v771, %v771
        %v961 = vmul.f32 %v772, %v772
        %v962 = vmul.f32 %v773, %v773
        %v963 = vmul.f32 %v774, %v774
        %v964 = vmul.f32 %v775, %v775
        %v965 = vmul.f32 %v776, %v776
        %v966 = vmul.f32 %v777, %v777
        %v967 = vmul.f32 %v778, %v778
        %v968 = vmul.f32 %v779, %v779
        %v969 = vmul.f32 %v780, %v780
        %v970 = vmul.f32 %v781, %v781
        %v971 = vmul.f32 %v782, %v782
        %v972 = vmul.f32 %v783, %v783
        %v973 = vmul.f32 %v784, %v784
        %v974 = vmul.f32 %v785, %v785
        %v975 = vmul.f32 %v786, %v786
        %v976 = vmul.f32 %v787, %v787
        %v977 = vmul.f32 %v788, %v788
        %v978 = vmul.f32 %v789, %v789
        %v979 = vmul.f32 %v790, %v790
        %v980 = vmul.f32 %v791, %v791
        %v981 = vmul.f32 %v792, %v792
        %v982 = vmul.f32 %v793, %v793
        %v983 = vmul.f32 %v794, %v794
        %v984 = vmul.f32 %v795, %v795
        %v985 = vmul.f32 %v796, %v796
        %v986 = vmul.f32 %v797, %v797
        %v987 = vmul.f32 %v798, %v798
        %v988 = vmul.f32 %v799, %v799
        %v989 = vmul.f32 %v800, %v800
        %v990 = vmul.f32 %v801, %v801
        %v991 = vmul.f32 %v802, %v802
        %v992 = vmul.f32 %v803, %v803
        %v993 = vmul.f32 %v804, %v804
        %v994 = vmul.f32 %v805, %v805
        %v995 = vmul.f32 %v806, %v806
        %v996 = vmul.f32 %v807, %v807
        %v997 = vmul.f32 %v808, %v808
        %v998 = vmul.f32 %v809, %v809
        %v999 = vmul.f32 %v810, %v810
        %v1000 = vmul.f32 %v811, %v811
        %v1001 = vmul.f32 %v812, %v812
        %v1002 = vmul.f32 %v813, %v813
        %v1003 = vmul.f32 %v814, %v814
        %v1004 = vmul.f32 %v815, %v815
        %v1005 = vmul.f32 %v816, %v816
        %v1006 = vmul.f32 %v817, %v817
        %v1007 = vmul.f32 %v818, %v818
        %v1008 = vmul.f32 %v819, %v819
        %v1009 = vmul.f32 %v820, %v820
        %v1010 = vmul.f32 %v821, %v821
        %v1011 = vmul.f32 %v822, %v822
        %v1012 = vmul.f32 %v823, %v823
        %v1013 = vmul.f32 %v824, %v824
        %v1014 = vmul.f32 %v825, %v825
        %v1015 = vmul.f32 %v826, %v826
        %v1016 = vmul.f32 %v827, %v827
        %v1017 = vmul.f32 %v828, %v828
        %v1018 = vmul.f32 %v829, %v829
        %v1019 = vmul.f32 %v830, %v830
        %v1020 = vmul.f32 %v831, %v831
        %v1021 = vmul.f32 %v832, %v832
        %v1022 = vmul.f32 %v833, %v833
        %v1023 = vmul.f32 %v834, %v834
        %v1024 = vmul.f32 %v835, %v835
        %v1025 = vmul.f32 %v836, %v836
        %v1026 = vmul.f32 %v837, %v837
        %v1027 = vmul.f32 %v838, %v838
        %v1028 = vmul.f32 %v839, %v839
        %v1029 = vmul.f32 %v840, %v840
        %v1030 = vmul.f32 %v841, %v841
        %v1031 = vmul.f32 %v842, %v842
        %v1032 = vmul.f32 %v843, %v843
        %v1033 = vmul.f32 %v844, %v844
        %v1034 = vmul.f32 %v845, %v845
        %v1035 = vmul.f32 %v846, %v846
        %v1036 = vmul.f32 %v847, %v847
        %v1037 = vmul.f32 %v848, %v848
        %v1038 = vmul.f32 %v849, %v849
        %v1039 = vmul.f32 %v850, %v850
        %v1040 = vmul.f32 %v851, %v851
        %v1041 = vmul.f32 %v852, %v852
        %v1042 = vmul.f32 %v853, %v853
        %v1043 = vmul.f32 %v854, %v854
        %v1044 = vmul.f32 %v855, %v855
        %v1045 = vmul.f32 %v856, %v856
        %v1046 = vmul.f32 %v857, %v857
        %v1047 = vmul.f32 %v858, %v858
        %v1048 = vmul.f32 %v859, %v859
        %v1049 = vmul.f32 %v860, %v860
        %v1050 = vmul.f32 %v861, %v861
        %v1051 = vmul.f32 %v862, %v862
        %v1052 = vmul.f32 %v863, %v863
        %v1053 = vmul.f32 %v864, %v864
        %v1054 = vmul.f32 %v865, %v865
        %v1055 = vmul.f32 %v866, %v866
        %v1056 = vmul.f32 %v867, %v867
        %v1057 = vmul.f32 %v868, %v868
        %v1058 = vmul.f32 %v869, %v869
        %v1059 = vmul.f32 %v870, %v870
        %v1060 = vmul.f32 %v871, %v871
        %v1061 = vmul.f32 %v872, %v872
        %v1062 = vmul.f32 %v873, %v873
        %v1063 = vmul.f32 %v874, %v874
        %v1064 = vmul.f32 %v875, %v875
        %v1065 = vmul.f32 %v876, %v876
        %v1066 = vmul.f32 %v877, %v877
        %v1067 = vmul.f32 %v878, %v878
        %v1068 = vmul.f32 %v879, %v879
        %v1069 = vmul.f32 %v880, %v880
        %v1070 = vmul.f32 %v881, %v881
        %v1071 = vmul.f32 %v882, %v882
        %v1072 = vmul.f32 %v883, %v883
        %v1073 = vmul.f32 %v884, %v884
        %v1074 = vadd.f32 %v885, %v886
        %v1075 = vadd.f32 %v1074, %v887
        %v1076 = vadd.f32 %v1075, %v888
        %v1077 = vadd.f32 %v1076, %v889
        %v1078 = vadd.f32 %v1077, %v890
        %v1079 = vsel %vm430, %v891, 0.0
        %v1080 = vadd.f32 %v1078, %v1079
        %1081 = vadd.xlane.f32.xlu0 %v1080
        %v1082 = vpop.xlane.xlu0 %1081
        %v1083 = vadd.f32 %v892, %v893
        %v1084 = vadd.f32 %v1083, %v894
        %v1085 = vadd.f32 %v1084, %v895
        %v1086 = vadd.f32 %v1085, %v896
        %v1087 = vadd.f32 %v1086, %v897
        %v1088 = vsel %vm430, %v898, 0.0
        %v1089 = vadd.f32 %v1087, %v1088
        %1090 = vadd.xlane.f32.xlu0 %v1089
        %v1091 = vpop.xlane.xlu0 %1090
        %v1092 = vadd.f32 %v899, %v900
        %v1093 = vadd.f32 %v1092, %v901
        %v1094 = vadd.f32 %v1093, %v902
        %v1095 = vadd.f32 %v1094, %v903
        %v1096 = vadd.f32 %v1095, %v904
        %v1097 = vsel %vm430, %v905, 0.0
        %v1098 = vadd.f32 %v1096, %v1097
        %1099 = vadd.xlane.f32.xlu0 %v1098
        %v1100 = vpop.xlane.xlu0 %1099
        %v1101 = vadd.f32 %v906, %v907
        %v1102 = vadd.f32 %v1101, %v908
        %v1103 = vadd.f32 %v1102, %v909
        %v1104 = vadd.f32 %v1103, %v910
        %v1105 = vadd.f32 %v1104, %v911
        %v1106 = vsel %vm430, %v912, 0.0
        %v1107 = vadd.f32 %v1105, %v1106
        %1108 = vadd.xlane.f32.xlu0 %v1107
        %v1109 = vpop.xlane.xlu0 %1108
        %v1110 = vadd.f32 %v913, %v914
        %v1111 = vadd.f32 %v1110, %v915
        %v1112 = vadd.f32 %v1111, %v916
        %v1113 = vadd.f32 %v1112, %v917
        %v1114 = vadd.f32 %v1113, %v918
        %v1115 = vsel %vm430, %v919, 0.0
        %v1116 = vadd.f32 %v1114, %v1115
        %1117 = vadd.xlane.f32.xlu0 %v1116
        %v1118 = vpop.xlane.xlu0 %1117
        %v1119 = vadd.f32 %v920, %v921
        %v1120 = vadd.f32 %v1119, %v922
        %v1121 = vadd.f32 %v1120, %v923
        %v1122 = vadd.f32 %v1121, %v924
        %v1123 = vadd.f32 %v1122, %v925
        %v1124 = vsel %vm430, %v926, 0.0
        %v1125 = vadd.f32 %v1123, %v1124
        %1126 = vadd.xlane.f32.xlu0 %v1125
        %v1127 = vpop.xlane.xlu0 %1126
        %v1128 = vadd.f32 %v927, %v928
        %v1129 = vadd.f32 %v1128, %v929
        %v1130 = vadd.f32 %v1129, %v930
        %v1131 = vadd.f32 %v1130, %v931
        %v1132 = vadd.f32 %v1131, %v932
        %v1133 = vsel %vm430, %v933, 0.0
        %v1134 = vadd.f32 %v1132, %v1133
        %1135 = vadd.xlane.f32.xlu0 %v1134
        %v1136 = vpop.xlane.xlu0 %1135
        %v1137 = vadd.f32 %v934, %v935
        %v1138 = vadd.f32 %v1137, %v936
        %v1139 = vadd.f32 %v1138, %v937
        %v1140 = vadd.f32 %v1139, %v938
        %v1141 = vadd.f32 %v1140, %v939
        %v1142 = vsel %vm430, %v940, 0.0
        %v1143 = vadd.f32 %v1141, %v1142
        %1144 = vadd.xlane.f32.xlu0 %v1143
        %v1145 = vpop.xlane.xlu0 %1144
        %v1146 = vadd.f32 %v941, %v942
        %v1147 = vadd.f32 %v1146, %v943
        %v1148 = vadd.f32 %v1147, %v944
        %v1149 = vadd.f32 %v1148, %v945
        %v1150 = vadd.f32 %v1149, %v946
        %v1151 = vsel %vm430, %v947, 0.0
        %v1152 = vadd.f32 %v1150, %v1151
        %1153 = vadd.xlane.f32.xlu0 %v1152
        %v1154 = vpop.xlane.xlu0 %1153
        %v1155 = vadd.f32 %v948, %v949
        %v1156 = vadd.f32 %v1155, %v950
        %v1157 = vadd.f32 %v1156, %v951
        %v1158 = vadd.f32 %v1157, %v952
        %v1159 = vadd.f32 %v1158, %v953
        %v1160 = vsel %vm430, %v954, 0.0
        %v1161 = vadd.f32 %v1159, %v1160
        %1162 = vadd.xlane.f32.xlu0 %v1161
        %v1163 = vpop.xlane.xlu0 %1162
        %v1164 = vadd.f32 %v955, %v956
        %v1165 = vadd.f32 %v1164, %v957
        %v1166 = vadd.f32 %v1165, %v958
        %v1167 = vadd.f32 %v1166, %v959
        %v1168 = vadd.f32 %v1167, %v960
        %v1169 = vsel %vm430, %v961, 0.0
        %v1170 = vadd.f32 %v1168, %v1169
        %1171 = vadd.xlane.f32.xlu0 %v1170
        %v1172 = vpop.xlane.xlu0 %1171
        %v1173 = vadd.f32 %v962, %v963
        %v1174 = vadd.f32 %v1173, %v964
        %v1175 = vadd.f32 %v1174, %v965
        %v1176 = vadd.f32 %v1175, %v966
        %v1177 = vadd.f32 %v1176, %v967
        %v1178 = vsel %vm430, %v968, 0.0
        %v1179 = vadd.f32 %v1177, %v1178
        %1180 = vadd.xlane.f32.xlu0 %v1179
        %v1181 = vpop.xlane.xlu0 %1180
        %v1182 = vadd.f32 %v969, %v970
        %v1183 = vadd.f32 %v1182, %v971
        %v1184 = vadd.f32 %v1183, %v972
        %v1185 = vadd.f32 %v1184, %v973
        %v1186 = vadd.f32 %v1185, %v974
        %v1187 = vsel %vm430, %v975, 0.0
        %v1188 = vadd.f32 %v1186, %v1187
        %1189 = vadd.xlane.f32.xlu0 %v1188
        %v1190 = vpop.xlane.xlu0 %1189
        %v1191 = vadd.f32 %v976, %v977
        %v1192 = vadd.f32 %v1191, %v978
        %v1193 = vadd.f32 %v1192, %v979
        %v1194 = vadd.f32 %v1193, %v980
        %v1195 = vadd.f32 %v1194, %v981
        %v1196 = vsel %vm430, %v982, 0.0
        %v1197 = vadd.f32 %v1195, %v1196
        %1198 = vadd.xlane.f32.xlu0 %v1197
        %v1199 = vpop.xlane.xlu0 %1198
        %v1200 = vadd.f32 %v983, %v984
        %v1201 = vadd.f32 %v1200, %v985
        %v1202 = vadd.f32 %v1201, %v986
        %v1203 = vadd.f32 %v1202, %v987
        %v1204 = vadd.f32 %v1203, %v988
        %v1205 = vsel %vm430, %v989, 0.0
        %v1206 = vadd.f32 %v1204, %v1205
        %1207 = vadd.xlane.f32.xlu0 %v1206
        %v1208 = vpop.xlane.xlu0 %1207
        %v1209 = vadd.f32 %v990, %v991
        %v1210 = vadd.f32 %v1209, %v992
        %v1211 = vadd.f32 %v1210, %v993
        %v1212 = vadd.f32 %v1211, %v994
        %v1213 = vadd.f32 %v1212, %v995
        %v1214 = vsel %vm430, %v996, 0.0
        %v1215 = vadd.f32 %v1213, %v1214
        %1216 = vadd.xlane.f32.xlu0 %v1215
        %v1217 = vpop.xlane.xlu0 %1216
        %v1218 = vadd.f32 %v997, %v998
        %v1219 = vadd.f32 %v1218, %v999
        %v1220 = vadd.f32 %v1219, %v1000
        %v1221 = vadd.f32 %v1220, %v1001
        %v1222 = vadd.f32 %v1221, %v1002
        %v1223 = vsel %vm430, %v1003, 0.0
        %v1224 = vadd.f32 %v1222, %v1223
        %1225 = vadd.xlane.f32.xlu0 %v1224
        %v1226 = vpop.xlane.xlu0 %1225
        %v1227 = vadd.f32 %v1004, %v1005
        %v1228 = vadd.f32 %v1227, %v1006
        %v1229 = vadd.f32 %v1228, %v1007
        %v1230 = vadd.f32 %v1229, %v1008
        %v1231 = vadd.f32 %v1230, %v1009
        %v1232 = vsel %vm430, %v1010, 0.0
        %v1233 = vadd.f32 %v1231, %v1232
        %1234 = vadd.xlane.f32.xlu0 %v1233
        %v1235 = vpop.xlane.xlu0 %1234
        %v1236 = vadd.f32 %v1011, %v1012
        %v1237 = vadd.f32 %v1236, %v1013
        %v1238 = vadd.f32 %v1237, %v1014
        %v1239 = vadd.f32 %v1238, %v1015
        %v1240 = vadd.f32 %v1239, %v1016
        %v1241 = vsel %vm430, %v1017, 0.0
        %v1242 = vadd.f32 %v1240, %v1241
        %1243 = vadd.xlane.f32.xlu0 %v1242
        %v1244 = vpop.xlane.xlu0 %1243
        %v1245 = vadd.f32 %v1018, %v1019
        %v1246 = vadd.f32 %v1245, %v1020
        %v1247 = vadd.f32 %v1246, %v1021
        %v1248 = vadd.f32 %v1247, %v1022
        %v1249 = vadd.f32 %v1248, %v1023
        %v1250 = vsel %vm430, %v1024, 0.0
        %v1251 = vadd.f32 %v1249, %v1250
        %1252 = vadd.xlane.f32.xlu0 %v1251
        %v1253 = vpop.xlane.xlu0 %1252
        %v1254 = vadd.f32 %v1025, %v1026
        %v1255 = vadd.f32 %v1254, %v1027
        %v1256 = vadd.f32 %v1255, %v1028
        %v1257 = vadd.f32 %v1256, %v1029
        %v1258 = vadd.f32 %v1257, %v1030
        %v1259 = vsel %vm430, %v1031, 0.0
        %v1260 = vadd.f32 %v1258, %v1259
        %1261 = vadd.xlane.f32.xlu0 %v1260
        %v1262 = vpop.xlane.xlu0 %1261
        %v1263 = vadd.f32 %v1032, %v1033
        %v1264 = vadd.f32 %v1263, %v1034
        %v1265 = vadd.f32 %v1264, %v1035
        %v1266 = vadd.f32 %v1265, %v1036
        %v1267 = vadd.f32 %v1266, %v1037
        %v1268 = vsel %vm430, %v1038, 0.0
        %v1269 = vadd.f32 %v1267, %v1268
        %1270 = vadd.xlane.f32.xlu0 %v1269
        %v1271 = vpop.xlane.xlu0 %1270
        %v1272 = vadd.f32 %v1039, %v1040
        %v1273 = vadd.f32 %v1272, %v1041
        %v1274 = vadd.f32 %v1273, %v1042
        %v1275 = vadd.f32 %v1274, %v1043
        %v1276 = vadd.f32 %v1275, %v1044
        %v1277 = vsel %vm430, %v1045, 0.0
        %v1278 = vadd.f32 %v1276, %v1277
        %1279 = vadd.xlane.f32.xlu0 %v1278
        %v1280 = vpop.xlane.xlu0 %1279
        %v1281 = vadd.f32 %v1046, %v1047
        %v1282 = vadd.f32 %v1281, %v1048
        %v1283 = vadd.f32 %v1282, %v1049
        %v1284 = vadd.f32 %v1283, %v1050
        %v1285 = vadd.f32 %v1284, %v1051
        %v1286 = vsel %vm430, %v1052, 0.0
        %v1287 = vadd.f32 %v1285, %v1286
        %1288 = vadd.xlane.f32.xlu0 %v1287
        %v1289 = vpop.xlane.xlu0 %1288
        %v1290 = vadd.f32 %v1053, %v1054
        %v1291 = vadd.f32 %v1290, %v1055
        %v1292 = vadd.f32 %v1291, %v1056
        %v1293 = vadd.f32 %v1292, %v1057
        %v1294 = vadd.f32 %v1293, %v1058
        %v1295 = vsel %vm430, %v1059, 0.0
        %v1296 = vadd.f32 %v1294, %v1295
        %1297 = vadd.xlane.f32.xlu0 %v1296
        %v1298 = vpop.xlane.xlu0 %1297
        %v1299 = vadd.f32 %v1060, %v1061
        %v1300 = vadd.f32 %v1299, %v1062
        %v1301 = vadd.f32 %v1300, %v1063
        %v1302 = vadd.f32 %v1301, %v1064
        %v1303 = vadd.f32 %v1302, %v1065
        %v1304 = vsel %vm430, %v1066, 0.0
        %v1305 = vadd.f32 %v1303, %v1304
        %1306 = vadd.xlane.f32.xlu0 %v1305
        %v1307 = vpop.xlane.xlu0 %1306
        %v1308 = vadd.f32 %v1067, %v1068
        %v1309 = vadd.f32 %v1308, %v1069
        %v1310 = vadd.f32 %v1309, %v1070
        %v1311 = vadd.f32 %v1310, %v1071
        %v1312 = vadd.f32 %v1311, %v1072
        %v1313 = vsel %vm430, %v1073, 0.0
        %v1314 = vadd.f32 %v1312, %v1313
        %1315 = vadd.xlane.f32.xlu0 %v1314
        %v1316 = vpop.xlane.xlu0 %1315
        %v1317 = vmul.f32 %v1082, 0.0012755102
        %v1318 = vmul.f32 %v1091, 0.0012755102
        %v1319 = vmul.f32 %v1100, 0.0012755102
        %v1320 = vmul.f32 %v1109, 0.0012755102
        %v1321 = vmul.f32 %v1118, 0.0012755102
        %v1322 = vmul.f32 %v1127, 0.0012755102
        %v1323 = vmul.f32 %v1136, 0.0012755102
        %v1324 = vmul.f32 %v1145, 0.0012755102
        %v1325 = vmul.f32 %v1154, 0.0012755102
        %v1326 = vmul.f32 %v1163, 0.0012755102
        %v1327 = vmul.f32 %v1172, 0.0012755102
        %v1328 = vmul.f32 %v1181, 0.0012755102
        %v1329 = vmul.f32 %v1190, 0.0012755102
        %v1330 = vmul.f32 %v1199, 0.0012755102
        %v1331 = vmul.f32 %v1208, 0.0012755102
        %v1332 = vmul.f32 %v1217, 0.0012755102
        %v1333 = vmul.f32 %v1226, 0.0012755102
        %v1334 = vmul.f32 %v1235, 0.0012755102
        %v1335 = vmul.f32 %v1244, 0.0012755102
        %v1336 = vmul.f32 %v1253, 0.0012755102
        %v1337 = vmul.f32 %v1262, 0.0012755102
        %v1338 = vmul.f32 %v1271, 0.0012755102
        %v1339 = vmul.f32 %v1280, 0.0012755102
        %v1340 = vmul.f32 %v1289, 0.0012755102
        %v1341 = vmul.f32 %v1298, 0.0012755102
        %v1342 = vmul.f32 %v1307, 0.0012755102
        %v1343 = vmul.f32 %v1316, 0.0012755102
        %v1344 = vadd.f32 %v1317, 0.001
        %v1345 = vadd.f32 %v1318, 0.001
        %v1346 = vadd.f32 %v1319, 0.001
        %v1347 = vadd.f32 %v1320, 0.001
        %v1348 = vadd.f32 %v1321, 0.001
        %v1349 = vadd.f32 %v1322, 0.001
        %v1350 = vadd.f32 %v1323, 0.001
        %v1351 = vadd.f32 %v1324, 0.001
        %v1352 = vadd.f32 %v1325, 0.001
        %v1353 = vadd.f32 %v1326, 0.001
        %v1354 = vadd.f32 %v1327, 0.001
        %v1355 = vadd.f32 %v1328, 0.001
        %v1356 = vadd.f32 %v1329, 0.001
        %v1357 = vadd.f32 %v1330, 0.001
        %v1358 = vadd.f32 %v1331, 0.001
        %v1359 = vadd.f32 %v1332, 0.001
        %v1360 = vadd.f32 %v1333, 0.001
        %v1361 = vadd.f32 %v1334, 0.001
        %v1362 = vadd.f32 %v1335, 0.001
        %v1363 = vadd.f32 %v1336, 0.001
        %v1364 = vadd.f32 %v1337, 0.001
        %v1365 = vadd.f32 %v1338, 0.001
        %v1366 = vadd.f32 %v1339, 0.001
        %v1367 = vadd.f32 %v1340, 0.001
        %v1368 = vadd.f32 %v1341, 0.001
        %v1369 = vadd.f32 %v1342, 0.001
        %v1370 = vadd.f32 %v1343, 0.001
        %v1371 = vrsqrt.pop %v1344
        %v1372 = vrsqrt.pop %v1345
        %v1373 = vrsqrt.pop %v1346
        %v1374 = vrsqrt.pop %v1347
        %v1375 = vrsqrt.pop %v1348
        %v1376 = vrsqrt.pop %v1349
        %v1377 = vrsqrt.pop %v1350
        %v1378 = vrsqrt.pop %v1351
        %v1379 = vrsqrt.pop %v1352
        %v1380 = vrsqrt.pop %v1353
        %v1381 = vrsqrt.pop %v1354
        %v1382 = vrsqrt.pop %v1355
        %v1383 = vrsqrt.pop %v1356
        %v1384 = vrsqrt.pop %v1357
        %v1385 = vrsqrt.pop %v1358
        %v1386 = vrsqrt.pop %v1359
        %v1387 = vrsqrt.pop %v1360
        %v1388 = vrsqrt.pop %v1361
        %v1389 = vrsqrt.pop %v1362
        %v1390 = vrsqrt.pop %v1363
        %v1391 = vrsqrt.pop %v1364
        %v1392 = vrsqrt.pop %v1365
        %v1393 = vrsqrt.pop %v1366
        %v1394 = vrsqrt.pop %v1367
        %v1395 = vrsqrt.pop %v1368
        %v1396 = vrsqrt.pop %v1369
        %v1397 = vrsqrt.pop %v1370
        %v1398 = vld [vmem:[%s227] sm:$0xff]
        %v1399 = vld [vmem:[%s227 + $0x8] sm:$0xff]
        %v1400 = vld [vmem:[%s227 + $0x10] sm:$0xff]
        %v1401 = vld [vmem:[%s227 + $0x18] sm:$0xff]
        %v1402 = vld [vmem:[%s227 + $0x20] sm:$0xff]
        %v1403 = vld [vmem:[%s227 + $0x28] sm:$0xff]
        %v1404 = vld [vmem:[%s227 + $0x30] sm:$0xff]
        %v1405 = vld [vmem:[%s227 + $0x38] sm:$0xff]
        %v1406 = vld [vmem:[%s227 + $0x40] sm:$0xff]
        %v1407 = vld [vmem:[%s227 + $0x48] sm:$0xff]
        %v1408 = vld [vmem:[%s227 + $0x50] sm:$0xff]
        %v1409 = vld [vmem:[%s227 + $0x58] sm:$0xff]
        %v1410 = vld [vmem:[%s227 + $0x60] sm:$0xff]
        %v1411 = vld [vmem:[%s227 + $0x68] sm:$0xff]
        %v1412 = vld [vmem:[%s227 + $0x70] sm:$0xff]
        %v1413 = vld [vmem:[%s227 + $0x78] sm:$0xff]
        %v1414 = vld [vmem:[%s227 + $0x80] sm:$0xff]
        %v1415 = vld [vmem:[%s227 + $0x88] sm:$0xff]
        %v1416 = vld [vmem:[%s227 + $0x90] sm:$0xff]
        %v1417 = vld [vmem:[%s227 + $0x98] sm:$0xff]
        %v1418 = vld [vmem:[%s227 + $0xa0] sm:$0xff]
        %v1419 = vld [vmem:[%s227 + $0xa8] sm:$0xff]
        %v1420 = vld [vmem:[%s227 + $0xb0] sm:$0xff]
        %v1421 = vld [vmem:[%s227 + $0xb8] sm:$0xff]
        %v1422 = vld [vmem:[%s227 + $0xc0] sm:$0xff]
        %v1423 = vld [vmem:[%s227 + $0xc8] sm:$0xff]
        %v1424 = vld [vmem:[%s227 + $0xd0] sm:$0xff]
        %v1425 = vmul.f32 %v1371, %v1398
        %v1426 = vmul.f32 %v1372, %v1399
        %v1427 = vmul.f32 %v1373, %v1400
        %v1428 = vmul.f32 %v1374, %v1401
        %v1429 = vmul.f32 %v1375, %v1402
        %v1430 = vmul.f32 %v1376, %v1403
        %v1431 = vmul.f32 %v1377, %v1404
        %v1432 = vmul.f32 %v1378, %v1405
        %v1433 = vmul.f32 %v1379, %v1406
        %v1434 = vmul.f32 %v1380, %v1407
        %v1435 = vmul.f32 %v1381, %v1408
        %v1436 = vmul.f32 %v1382, %v1409
        %v1437 = vmul.f32 %v1383, %v1410
        %v1438 = vmul.f32 %v1384, %v1411
        %v1439 = vmul.f32 %v1385, %v1412
        %v1440 = vmul.f32 %v1386, %v1413
        %v1441 = vmul.f32 %v1387, %v1414
        %v1442 = vmul.f32 %v1388, %v1415
        %v1443 = vmul.f32 %v1389, %v1416
        %v1444 = vmul.f32 %v1390, %v1417
        %v1445 = vmul.f32 %v1391, %v1418
        %v1446 = vmul.f32 %v1392, %v1419
        %v1447 = vmul.f32 %v1393, %v1420
        %v1448 = vmul.f32 %v1394, %v1421
        %v1449 = vmul.f32 %v1395, %v1422
        %v1450 = vmul.f32 %v1396, %v1423
        %v1451 = vmul.f32 %v1397, %v1424
        %1453 = vset.pattern.permute.xlu0 0
        %1454 = vperm.xlu0 %1453, %v1425
        %v1455 = vpop.permute.xlu0 %1454
        %1458 = vset.pattern.permute.xlu0 0
        %1459 = vperm.xlu0 %1458, %v1426
        %v1460 = vpop.permute.xlu0 %1459
        %1463 = vset.pattern.permute.xlu0 0
        %1464 = vperm.xlu0 %1463, %v1427
        %v1465 = vpop.permute.xlu0 %1464
        %1468 = vset.pattern.permute.xlu0 0
        %1469 = vperm.xlu0 %1468, %v1428
        %v1470 = vpop.permute.xlu0 %1469
        %1473 = vset.pattern.permute.xlu0 0
        %1474 = vperm.xlu0 %1473, %v1429
        %v1475 = vpop.permute.xlu0 %1474
        %1478 = vset.pattern.permute.xlu0 0
        %1479 = vperm.xlu0 %1478, %v1430
        %v1480 = vpop.permute.xlu0 %1479
        %1483 = vset.pattern.permute.xlu0 0
        %1484 = vperm.xlu0 %1483, %v1431
        %v1485 = vpop.permute.xlu0 %1484
        %1488 = vset.pattern.permute.xlu0 0
        %1489 = vperm.xlu0 %1488, %v1432
        %v1490 = vpop.permute.xlu0 %1489
        %1493 = vset.pattern.permute.xlu0 0
        %1494 = vperm.xlu0 %1493, %v1433
        %v1495 = vpop.permute.xlu0 %1494
        %1498 = vset.pattern.permute.xlu0 0
        %1499 = vperm.xlu0 %1498, %v1434
        %v1500 = vpop.permute.xlu0 %1499
        %1503 = vset.pattern.permute.xlu0 0
        %1504 = vperm.xlu0 %1503, %v1435
        %v1505 = vpop.permute.xlu0 %1504
        %1508 = vset.pattern.permute.xlu0 0
        %1509 = vperm.xlu0 %1508, %v1436
        %v1510 = vpop.permute.xlu0 %1509
        %1513 = vset.pattern.permute.xlu0 0
        %1514 = vperm.xlu0 %1513, %v1437
        %v1515 = vpop.permute.xlu0 %1514
        %1518 = vset.pattern.permute.xlu0 0
        %1519 = vperm.xlu0 %1518, %v1438
        %v1520 = vpop.permute.xlu0 %1519
        %1523 = vset.pattern.permute.xlu0 0
        %1524 = vperm.xlu0 %1523, %v1439
        %v1525 = vpop.permute.xlu0 %1524
        %1528 = vset.pattern.permute.xlu0 0
        %1529 = vperm.xlu0 %1528, %v1440
        %v1530 = vpop.permute.xlu0 %1529
        %1533 = vset.pattern.permute.xlu0 0
        %1534 = vperm.xlu0 %1533, %v1441
        %v1535 = vpop.permute.xlu0 %1534
        %1538 = vset.pattern.permute.xlu0 0
        %1539 = vperm.xlu0 %1538, %v1442
        %v1540 = vpop.permute.xlu0 %1539
        %1543 = vset.pattern.permute.xlu0 0
        %1544 = vperm.xlu0 %1543, %v1443
        %v1545 = vpop.permute.xlu0 %1544
        %1548 = vset.pattern.permute.xlu0 0
        %1549 = vperm.xlu0 %1548, %v1444
        %v1550 = vpop.permute.xlu0 %1549
        %1553 = vset.pattern.permute.xlu0 0
        %1554 = vperm.xlu0 %1553, %v1445
        %v1555 = vpop.permute.xlu0 %1554
        %1558 = vset.pattern.permute.xlu0 0
        %1559 = vperm.xlu0 %1558, %v1446
        %v1560 = vpop.permute.xlu0 %1559
        %1563 = vset.pattern.permute.xlu0 0
        %1564 = vperm.xlu0 %1563, %v1447
        %v1565 = vpop.permute.xlu0 %1564
        %1568 = vset.pattern.permute.xlu0 0
        %1569 = vperm.xlu0 %1568, %v1448
        %v1570 = vpop.permute.xlu0 %1569
        %1573 = vset.pattern.permute.xlu0 0
        %1574 = vperm.xlu0 %1573, %v1449
        %v1575 = vpop.permute.xlu0 %1574
        %1578 = vset.pattern.permute.xlu0 0
        %1579 = vperm.xlu0 %1578, %v1450
        %v1580 = vpop.permute.xlu0 %1579
        %1583 = vset.pattern.permute.xlu0 0
        %1584 = vperm.xlu0 %1583, %v1451
        %v1585 = vpop.permute.xlu0 %1584
        %v1587 = vmul.f32 %v696, %v1455
        %v1588 = vmul.f32 %v697, %v1455
        %v1589 = vmul.f32 %v698, %v1455
        %v1590 = vmul.f32 %v699, %v1455
        %v1591 = vmul.f32 %v700, %v1455
        %v1592 = vmul.f32 %v701, %v1455
        %v1593 = vmul.f32 %v702, %v1455
        %v1594 = vmul.f32 %v703, %v1460
        %v1595 = vmul.f32 %v704, %v1460
        %v1596 = vmul.f32 %v705, %v1460
        %v1597 = vmul.f32 %v706, %v1460
        %v1598 = vmul.f32 %v707, %v1460
        %v1599 = vmul.f32 %v708, %v1460
        %v1600 = vmul.f32 %v709, %v1460
        %v1601 = vmul.f32 %v710, %v1465
        %v1602 = vmul.f32 %v711, %v1465
        %v1603 = vmul.f32 %v712, %v1465
        %v1604 = vmul.f32 %v713, %v1465
        %v1605 = vmul.f32 %v714, %v1465
        %v1606 = vmul.f32 %v715, %v1465
        %v1607 = vmul.f32 %v716, %v1465
        %v1608 = vmul.f32 %v717, %v1470
        %v1609 = vmul.f32 %v718, %v1470
        %v1610 = vmul.f32 %v719, %v1470
        %v1611 = vmul.f32 %v720, %v1470
        %v1612 = vmul.f32 %v721, %v1470
        %v1613 = vmul.f32 %v722, %v1470
        %v1614 = vmul.f32 %v723, %v1470
        %v1615 = vmul.f32 %v724, %v1475
        %v1616 = vmul.f32 %v725, %v1475
        %v1617 = vmul.f32 %v726, %v1475
        %v1618 = vmul.f32 %v727, %v1475
        %v1619 = vmul.f32 %v728, %v1475
        %v1620 = vmul.f32 %v729, %v1475
        %v1621 = vmul.f32 %v730, %v1475
        %v1622 = vmul.f32 %v731, %v1480
        %v1623 = vmul.f32 %v732, %v1480
        %v1624 = vmul.f32 %v733, %v1480
        %v1625 = vmul.f32 %v734, %v1480
        %v1626 = vmul.f32 %v735, %v1480
        %v1627 = vmul.f32 %v736, %v1480
        %v1628 = vmul.f32 %v737, %v1480
        %v1629 = vmul.f32 %v738, %v1485
        %v1630 = vmul.f32 %v739, %v1485
        %v1631 = vmul.f32 %v740, %v1485
        %v1632 = vmul.f32 %v741, %v1485
        %v1633 = vmul.f32 %v742, %v1485
        %v1634 = vmul.f32 %v743, %v1485
        %v1635 = vmul.f32 %v744, %v1485
        %v1636 = vmul.f32 %v745, %v1490
        %v1637 = vmul.f32 %v746, %v1490
        %v1638 = vmul.f32 %v747, %v1490
        %v1639 = vmul.f32 %v748, %v1490
        %v1640 = vmul.f32 %v749, %v1490
        %v1641 = vmul.f32 %v750, %v1490
        %v1642 = vmul.f32 %v751, %v1490
        %v1643 = vmul.f32 %v752, %v1495
        %v1644 = vmul.f32 %v753, %v1495
        %v1645 = vmul.f32 %v754, %v1495
        %v1646 = vmul.f32 %v755, %v1495
        %v1647 = vmul.f32 %v756, %v1495
        %v1648 = vmul.f32 %v757, %v1495
        %v1649 = vmul.f32 %v758, %v1495
        %v1650 = vmul.f32 %v759, %v1500
        %v1651 = vmul.f32 %v760, %v1500
        %v1652 = vmul.f32 %v761, %v1500
        %v1653 = vmul.f32 %v762, %v1500
        %v1654 = vmul.f32 %v763, %v1500
        %v1655 = vmul.f32 %v764, %v1500
        %v1656 = vmul.f32 %v765, %v1500
        %v1657 = vmul.f32 %v766, %v1505
        %v1658 = vmul.f32 %v767, %v1505
        %v1659 = vmul.f32 %v768, %v1505
        %v1660 = vmul.f32 %v769, %v1505
        %v1661 = vmul.f32 %v770, %v1505
        %v1662 = vmul.f32 %v771, %v1505
        %v1663 = vmul.f32 %v772, %v1505
        %v1664 = vmul.f32 %v773, %v1510
        %v1665 = vmul.f32 %v774, %v1510
        %v1666 = vmul.f32 %v775, %v1510
        %v1667 = vmul.f32 %v776, %v1510
        %v1668 = vmul.f32 %v777, %v1510
        %v1669 = vmul.f32 %v778, %v1510
        %v1670 = vmul.f32 %v779, %v1510
        %v1671 = vmul.f32 %v780, %v1515
        %v1672 = vmul.f32 %v781, %v1515
        %v1673 = vmul.f32 %v782, %v1515
        %v1674 = vmul.f32 %v783, %v1515
        %v1675 = vmul.f32 %v784, %v1515
        %v1676 = vmul.f32 %v785, %v1515
        %v1677 = vmul.f32 %v786, %v1515
        %v1678 = vmul.f32 %v787, %v1520
        %v1679 = vmul.f32 %v788, %v1520
        %v1680 = vmul.f32 %v789, %v1520
        %v1681 = vmul.f32 %v790, %v1520
        %v1682 = vmul.f32 %v791, %v1520
        %v1683 = vmul.f32 %v792, %v1520
        %v1684 = vmul.f32 %v793, %v1520
        %v1685 = vmul.f32 %v794, %v1525
        %v1686 = vmul.f32 %v795, %v1525
        %v1687 = vmul.f32 %v796, %v1525
        %v1688 = vmul.f32 %v797, %v1525
        %v1689 = vmul.f32 %v798, %v1525
        %v1690 = vmul.f32 %v799, %v1525
        %v1691 = vmul.f32 %v800, %v1525
        %v1692 = vmul.f32 %v801, %v1530
        %v1693 = vmul.f32 %v802, %v1530
        %v1694 = vmul.f32 %v803, %v1530
        %v1695 = vmul.f32 %v804, %v1530
        %v1696 = vmul.f32 %v805, %v1530
        %v1697 = vmul.f32 %v806, %v1530
        %v1698 = vmul.f32 %v807, %v1530
        %v1699 = vmul.f32 %v808, %v1535
        %v1700 = vmul.f32 %v809, %v1535
        %v1701 = vmul.f32 %v810, %v1535
        %v1702 = vmul.f32 %v811, %v1535
        %v1703 = vmul.f32 %v812, %v1535
        %v1704 = vmul.f32 %v813, %v1535
        %v1705 = vmul.f32 %v814, %v1535
        %v1706 = vmul.f32 %v815, %v1540
        %v1707 = vmul.f32 %v816, %v1540
        %v1708 = vmul.f32 %v817, %v1540
        %v1709 = vmul.f32 %v818, %v1540
        %v1710 = vmul.f32 %v819, %v1540
        %v1711 = vmul.f32 %v820, %v1540
        %v1712 = vmul.f32 %v821, %v1540
        %v1713 = vmul.f32 %v822, %v1545
        %v1714 = vmul.f32 %v823, %v1545
        %v1715 = vmul.f32 %v824, %v1545
        %v1716 = vmul.f32 %v825, %v1545
        %v1717 = vmul.f32 %v826, %v1545
        %v1718 = vmul.f32 %v827, %v1545
        %v1719 = vmul.f32 %v828, %v1545
        %v1720 = vmul.f32 %v829, %v1550
        %v1721 = vmul.f32 %v830, %v1550
        %v1722 = vmul.f32 %v831, %v1550
        %v1723 = vmul.f32 %v832, %v1550
        %v1724 = vmul.f32 %v833, %v1550
        %v1725 = vmul.f32 %v834, %v1550
        %v1726 = vmul.f32 %v835, %v1550
        %v1727 = vmul.f32 %v836, %v1555
        %v1728 = vmul.f32 %v837, %v1555
        %v1729 = vmul.f32 %v838, %v1555
        %v1730 = vmul.f32 %v839, %v1555
        %v1731 = vmul.f32 %v840, %v1555
        %v1732 = vmul.f32 %v841, %v1555
        %v1733 = vmul.f32 %v842, %v1555
        %v1734 = vmul.f32 %v843, %v1560
        %v1735 = vmul.f32 %v844, %v1560
        %v1736 = vmul.f32 %v845, %v1560
        %v1737 = vmul.f32 %v846, %v1560
        %v1738 = vmul.f32 %v847, %v1560
        %v1739 = vmul.f32 %v848, %v1560
        %v1740 = vmul.f32 %v849, %v1560
        %v1741 = vmul.f32 %v850, %v1565
        %v1742 = vmul.f32 %v851, %v1565
        %v1743 = vmul.f32 %v852, %v1565
        %v1744 = vmul.f32 %v853, %v1565
        %v1745 = vmul.f32 %v854, %v1565
        %v1746 = vmul.f32 %v855, %v1565
        %v1747 = vmul.f32 %v856, %v1565
        %v1748 = vmul.f32 %v857, %v1570
        %v1749 = vmul.f32 %v858, %v1570
        %v1750 = vmul.f32 %v859, %v1570
        %v1751 = vmul.f32 %v860, %v1570
        %v1752 = vmul.f32 %v861, %v1570
        %v1753 = vmul.f32 %v862, %v1570
        %v1754 = vmul.f32 %v863, %v1570
        %v1755 = vmul.f32 %v864, %v1575
        %v1756 = vmul.f32 %v865, %v1575
        %v1757 = vmul.f32 %v866, %v1575
        %v1758 = vmul.f32 %v867, %v1575
        %v1759 = vmul.f32 %v868, %v1575
        %v1760 = vmul.f32 %v869, %v1575
        %v1761 = vmul.f32 %v870, %v1575
        %v1762 = vmul.f32 %v871, %v1580
        %v1763 = vmul.f32 %v872, %v1580
        %v1764 = vmul.f32 %v873, %v1580
        %v1765 = vmul.f32 %v874, %v1580
        %v1766 = vmul.f32 %v875, %v1580
        %v1767 = vmul.f32 %v876, %v1580
        %v1768 = vmul.f32 %v877, %v1580
        %v1769 = vmul.f32 %v878, %v1585
        %v1770 = vmul.f32 %v879, %v1585
        %v1771 = vmul.f32 %v880, %v1585
        %v1772 = vmul.f32 %v881, %v1585
        %v1773 = vmul.f32 %v882, %v1585
        %v1774 = vmul.f32 %v883, %v1585
        %v1775 = vmul.f32 %v884, %v1585
        %v1776 = vld [vmem:[%s233] sm:$0xff]
        %v1777 = vld [vmem:[%s233 + $0x8] sm:$0xff]
        %v1778 = vld [vmem:[%s233 + $0x10] sm:$0xff]
        %v1779 = vld [vmem:[%s233 + $0x18] sm:$0xff]
        %v1780 = vld [vmem:[%s233 + $0x20] sm:$0xff]
        %v1781 = vld [vmem:[%s233 + $0x28] sm:$0xff]
        %v1782 = vld [vmem:[%s233 + $0x30] sm:$0xff]
        %v1783 = vld [vmem:[%s233 + $0x38] sm:$0xff]
        %v1784 = vld [vmem:[%s233 + $0x40] sm:$0xff]
        %v1785 = vld [vmem:[%s233 + $0x48] sm:$0xff]
        %v1786 = vld [vmem:[%s233 + $0x50] sm:$0xff]
        %v1787 = vld [vmem:[%s233 + $0x58] sm:$0xff]
        %v1788 = vld [vmem:[%s233 + $0x60] sm:$0xff]
        %v1789 = vld [vmem:[%s233 + $0x68] sm:$0xff]
        %v1790 = vld [vmem:[%s233 + $0x70] sm:$0xff]
        %v1791 = vld [vmem:[%s233 + $0x78] sm:$0xff]
        %v1792 = vld [vmem:[%s233 + $0x80] sm:$0xff]
        %v1793 = vld [vmem:[%s233 + $0x88] sm:$0xff]
        %v1794 = vld [vmem:[%s233 + $0x90] sm:$0xff]
        %v1795 = vld [vmem:[%s233 + $0x98] sm:$0xff]
        %v1796 = vld [vmem:[%s233 + $0xa0] sm:$0xff]
        %v1797 = vld [vmem:[%s233 + $0xa8] sm:$0xff]
        %v1798 = vld [vmem:[%s233 + $0xb0] sm:$0xff]
        %v1799 = vld [vmem:[%s233 + $0xb8] sm:$0xff]
        %v1800 = vld [vmem:[%s233 + $0xc0] sm:$0xff]
        %v1801 = vld [vmem:[%s233 + $0xc8] sm:$0xff]
        %v1802 = vld [vmem:[%s233 + $0xd0] sm:$0xff]
        %1804 = vset.pattern.permute.xlu0 0
        %1805 = vperm.xlu0 %1804, %v1776
        %v1806 = vpop.permute.xlu0 %1805
        %1809 = vset.pattern.permute.xlu0 0
        %1810 = vperm.xlu0 %1809, %v1777
        %v1811 = vpop.permute.xlu0 %1810
        %1814 = vset.pattern.permute.xlu0 0
        %1815 = vperm.xlu0 %1814, %v1778
        %v1816 = vpop.permute.xlu0 %1815
        %1819 = vset.pattern.permute.xlu0 0
        %1820 = vperm.xlu0 %1819, %v1779
        %v1821 = vpop.permute.xlu0 %1820
        %1824 = vset.pattern.permute.xlu0 0
        %1825 = vperm.xlu0 %1824, %v1780
        %v1826 = vpop.permute.xlu0 %1825
        %1829 = vset.pattern.permute.xlu0 0
        %1830 = vperm.xlu0 %1829, %v1781
        %v1831 = vpop.permute.xlu0 %1830
        %1834 = vset.pattern.permute.xlu0 0
        %1835 = vperm.xlu0 %1834, %v1782
        %v1836 = vpop.permute.xlu0 %1835
        %1839 = vset.pattern.permute.xlu0 0
        %1840 = vperm.xlu0 %1839, %v1783
        %v1841 = vpop.permute.xlu0 %1840
        %1844 = vset.pattern.permute.xlu0 0
        %1845 = vperm.xlu0 %1844, %v1784
        %v1846 = vpop.permute.xlu0 %1845
        %1849 = vset.pattern.permute.xlu0 0
        %1850 = vperm.xlu0 %1849, %v1785
        %v1851 = vpop.permute.xlu0 %1850
        %1854 = vset.pattern.permute.xlu0 0
        %1855 = vperm.xlu0 %1854, %v1786
        %v1856 = vpop.permute.xlu0 %1855
        %1859 = vset.pattern.permute.xlu0 0
        %1860 = vperm.xlu0 %1859, %v1787
        %v1861 = vpop.permute.xlu0 %1860
        %1864 = vset.pattern.permute.xlu0 0
        %1865 = vperm.xlu0 %1864, %v1788
        %v1866 = vpop.permute.xlu0 %1865
        %1869 = vset.pattern.permute.xlu0 0
        %1870 = vperm.xlu0 %1869, %v1789
        %v1871 = vpop.permute.xlu0 %1870
        %1874 = vset.pattern.permute.xlu0 0
        %1875 = vperm.xlu0 %1874, %v1790
        %v1876 = vpop.permute.xlu0 %1875
        %1879 = vset.pattern.permute.xlu0 0
        %1880 = vperm.xlu0 %1879, %v1791
        %v1881 = vpop.permute.xlu0 %1880
        %1884 = vset.pattern.permute.xlu0 0
        %1885 = vperm.xlu0 %1884, %v1792
        %v1886 = vpop.permute.xlu0 %1885
        %1889 = vset.pattern.permute.xlu0 0
        %1890 = vperm.xlu0 %1889, %v1793
        %v1891 = vpop.permute.xlu0 %1890
        %1894 = vset.pattern.permute.xlu0 0
        %1895 = vperm.xlu0 %1894, %v1794
        %v1896 = vpop.permute.xlu0 %1895
        %1899 = vset.pattern.permute.xlu0 0
        %1900 = vperm.xlu0 %1899, %v1795
        %v1901 = vpop.permute.xlu0 %1900
        %1904 = vset.pattern.permute.xlu0 0
        %1905 = vperm.xlu0 %1904, %v1796
        %v1906 = vpop.permute.xlu0 %1905
        %1909 = vset.pattern.permute.xlu0 0
        %1910 = vperm.xlu0 %1909, %v1797
        %v1911 = vpop.permute.xlu0 %1910
        %1914 = vset.pattern.permute.xlu0 0
        %1915 = vperm.xlu0 %1914, %v1798
        %v1916 = vpop.permute.xlu0 %1915
        %1919 = vset.pattern.permute.xlu0 0
        %1920 = vperm.xlu0 %1919, %v1799
        %v1921 = vpop.permute.xlu0 %1920
        %1924 = vset.pattern.permute.xlu0 0
        %1925 = vperm.xlu0 %1924, %v1800
        %v1926 = vpop.permute.xlu0 %1925
        %1929 = vset.pattern.permute.xlu0 0
        %1930 = vperm.xlu0 %1929, %v1801
        %v1931 = vpop.permute.xlu0 %1930
        %1934 = vset.pattern.permute.xlu0 0
        %1935 = vperm.xlu0 %1934, %v1802
        %v1936 = vpop.permute.xlu0 %1935
        %v1938 = vadd.f32 %v1587, %v1806
        %v1939 = vadd.f32 %v1588, %v1806
        %v1940 = vadd.f32 %v1589, %v1806
        %v1941 = vadd.f32 %v1590, %v1806
        %v1942 = vadd.f32 %v1591, %v1806
        %v1943 = vadd.f32 %v1592, %v1806
        %v1944 = vadd.f32 %v1593, %v1806
        %v1945 = vadd.f32 %v1594, %v1811
        %v1946 = vadd.f32 %v1595, %v1811
        %v1947 = vadd.f32 %v1596, %v1811
        %v1948 = vadd.f32 %v1597, %v1811
        %v1949 = vadd.f32 %v1598, %v1811
        %v1950 = vadd.f32 %v1599, %v1811
        %v1951 = vadd.f32 %v1600, %v1811
        %v1952 = vadd.f32 %v1601, %v1816
        %v1953 = vadd.f32 %v1602, %v1816
        %v1954 = vadd.f32 %v1603, %v1816
        %v1955 = vadd.f32 %v1604, %v1816
        %v1956 = vadd.f32 %v1605, %v1816
        %v1957 = vadd.f32 %v1606, %v1816
        %v1958 = vadd.f32 %v1607, %v1816
        %v1959 = vadd.f32 %v1608, %v1821
        %v1960 = vadd.f32 %v1609, %v1821
        %v1961 = vadd.f32 %v1610, %v1821
        %v1962 = vadd.f32 %v1611, %v1821
        %v1963 = vadd.f32 %v1612, %v1821
        %v1964 = vadd.f32 %v1613, %v1821
        %v1965 = vadd.f32 %v1614, %v1821
        %v1966 = vadd.f32 %v1615, %v1826
        %v1967 = vadd.f32 %v1616, %v1826
        %v1968 = vadd.f32 %v1617, %v1826
        %v1969 = vadd.f32 %v1618, %v1826
        %v1970 = vadd.f32 %v1619, %v1826
        %v1971 = vadd.f32 %v1620, %v1826
        %v1972 = vadd.f32 %v1621, %v1826
        %v1973 = vadd.f32 %v1622, %v1831
        %v1974 = vadd.f32 %v1623, %v1831
        %v1975 = vadd.f32 %v1624, %v1831
        %v1976 = vadd.f32 %v1625, %v1831
        %v1977 = vadd.f32 %v1626, %v1831
        %v1978 = vadd.f32 %v1627, %v1831
        %v1979 = vadd.f32 %v1628, %v1831
        %v1980 = vadd.f32 %v1629, %v1836
        %v1981 = vadd.f32 %v1630, %v1836
        %v1982 = vadd.f32 %v1631, %v1836
        %v1983 = vadd.f32 %v1632, %v1836
        %v1984 = vadd.f32 %v1633, %v1836
        %v1985 = vadd.f32 %v1634, %v1836
        %v1986 = vadd.f32 %v1635, %v1836
        %v1987 = vadd.f32 %v1636, %v1841
        %v1988 = vadd.f32 %v1637, %v1841
        %v1989 = vadd.f32 %v1638, %v1841
        %v1990 = vadd.f32 %v1639, %v1841
        %v1991 = vadd.f32 %v1640, %v1841
        %v1992 = vadd.f32 %v1641, %v1841
        %v1993 = vadd.f32 %v1642, %v1841
        %v1994 = vadd.f32 %v1643, %v1846
        %v1995 = vadd.f32 %v1644, %v1846
        %v1996 = vadd.f32 %v1645, %v1846
        %v1997 = vadd.f32 %v1646, %v1846
        %v1998 = vadd.f32 %v1647, %v1846
        %v1999 = vadd.f32 %v1648, %v1846
        %v2000 = vadd.f32 %v1649, %v1846
        %v2001 = vadd.f32 %v1650, %v1851
        %v2002 = vadd.f32 %v1651, %v1851
        %v2003 = vadd.f32 %v1652, %v1851
        %v2004 = vadd.f32 %v1653, %v1851
        %v2005 = vadd.f32 %v1654, %v1851
        %v2006 = vadd.f32 %v1655, %v1851
        %v2007 = vadd.f32 %v1656, %v1851
        %v2008 = vadd.f32 %v1657, %v1856
        %v2009 = vadd.f32 %v1658, %v1856
        %v2010 = vadd.f32 %v1659, %v1856
        %v2011 = vadd.f32 %v1660, %v1856
        %v2012 = vadd.f32 %v1661, %v1856
        %v2013 = vadd.f32 %v1662, %v1856
        %v2014 = vadd.f32 %v1663, %v1856
        %v2015 = vadd.f32 %v1664, %v1861
        %v2016 = vadd.f32 %v1665, %v1861
        %v2017 = vadd.f32 %v1666, %v1861
        %v2018 = vadd.f32 %v1667, %v1861
        %v2019 = vadd.f32 %v1668, %v1861
        %v2020 = vadd.f32 %v1669, %v1861
        %v2021 = vadd.f32 %v1670, %v1861
        %v2022 = vadd.f32 %v1671, %v1866
        %v2023 = vadd.f32 %v1672, %v1866
        %v2024 = vadd.f32 %v1673, %v1866
        %v2025 = vadd.f32 %v1674, %v1866
        %v2026 = vadd.f32 %v1675, %v1866
        %v2027 = vadd.f32 %v1676, %v1866
        %v2028 = vadd.f32 %v1677, %v1866
        %v2029 = vadd.f32 %v1678, %v1871
        %v2030 = vadd.f32 %v1679, %v1871
        %v2031 = vadd.f32 %v1680, %v1871
        %v2032 = vadd.f32 %v1681, %v1871
        %v2033 = vadd.f32 %v1682, %v1871
        %v2034 = vadd.f32 %v1683, %v1871
        %v2035 = vadd.f32 %v1684, %v1871
        %v2036 = vadd.f32 %v1685, %v1876
        %v2037 = vadd.f32 %v1686, %v1876
        %v2038 = vadd.f32 %v1687, %v1876
        %v2039 = vadd.f32 %v1688, %v1876
        %v2040 = vadd.f32 %v1689, %v1876
        %v2041 = vadd.f32 %v1690, %v1876
        %v2042 = vadd.f32 %v1691, %v1876
        %v2043 = vadd.f32 %v1692, %v1881
        %v2044 = vadd.f32 %v1693, %v1881
        %v2045 = vadd.f32 %v1694, %v1881
        %v2046 = vadd.f32 %v1695, %v1881
        %v2047 = vadd.f32 %v1696, %v1881
        %v2048 = vadd.f32 %v1697, %v1881
        %v2049 = vadd.f32 %v1698, %v1881
        %v2050 = vadd.f32 %v1699, %v1886
        %v2051 = vadd.f32 %v1700, %v1886
        %v2052 = vadd.f32 %v1701, %v1886
        %v2053 = vadd.f32 %v1702, %v1886
        %v2054 = vadd.f32 %v1703, %v1886
        %v2055 = vadd.f32 %v1704, %v1886
        %v2056 = vadd.f32 %v1705, %v1886
        %v2057 = vadd.f32 %v1706, %v1891
        %v2058 = vadd.f32 %v1707, %v1891
        %v2059 = vadd.f32 %v1708, %v1891
        %v2060 = vadd.f32 %v1709, %v1891
        %v2061 = vadd.f32 %v1710, %v1891
        %v2062 = vadd.f32 %v1711, %v1891
        %v2063 = vadd.f32 %v1712, %v1891
        %v2064 = vadd.f32 %v1713, %v1896
        %v2065 = vadd.f32 %v1714, %v1896
        %v2066 = vadd.f32 %v1715, %v1896
        %v2067 = vadd.f32 %v1716, %v1896
        %v2068 = vadd.f32 %v1717, %v1896
        %v2069 = vadd.f32 %v1718, %v1896
        %v2070 = vadd.f32 %v1719, %v1896
        %v2071 = vadd.f32 %v1720, %v1901
        %v2072 = vadd.f32 %v1721, %v1901
        %v2073 = vadd.f32 %v1722, %v1901
        %v2074 = vadd.f32 %v1723, %v1901
        %v2075 = vadd.f32 %v1724, %v1901
        %v2076 = vadd.f32 %v1725, %v1901
        %v2077 = vadd.f32 %v1726, %v1901
        %v2078 = vadd.f32 %v1727, %v1906
        %v2079 = vadd.f32 %v1728, %v1906
        %v2080 = vadd.f32 %v1729, %v1906
        %v2081 = vadd.f32 %v1730, %v1906
        %v2082 = vadd.f32 %v1731, %v1906
        %v2083 = vadd.f32 %v1732, %v1906
        %v2084 = vadd.f32 %v1733, %v1906
        %v2085 = vadd.f32 %v1734, %v1911
        %v2086 = vadd.f32 %v1735, %v1911
        %v2087 = vadd.f32 %v1736, %v1911
        %v2088 = vadd.f32 %v1737, %v1911
        %v2089 = vadd.f32 %v1738, %v1911
        %v2090 = vadd.f32 %v1739, %v1911
        %v2091 = vadd.f32 %v1740, %v1911
        %v2092 = vadd.f32 %v1741, %v1916
        %v2093 = vadd.f32 %v1742, %v1916
        %v2094 = vadd.f32 %v1743, %v1916
        %v2095 = vadd.f32 %v1744, %v1916
        %v2096 = vadd.f32 %v1745, %v1916
        %v2097 = vadd.f32 %v1746, %v1916
        %v2098 = vadd.f32 %v1747, %v1916
        %v2099 = vadd.f32 %v1748, %v1921
        %v2100 = vadd.f32 %v1749, %v1921
        %v2101 = vadd.f32 %v1750, %v1921
        %v2102 = vadd.f32 %v1751, %v1921
        %v2103 = vadd.f32 %v1752, %v1921
        %v2104 = vadd.f32 %v1753, %v1921
        %v2105 = vadd.f32 %v1754, %v1921
        %v2106 = vadd.f32 %v1755, %v1926
        %v2107 = vadd.f32 %v1756, %v1926
        %v2108 = vadd.f32 %v1757, %v1926
        %v2109 = vadd.f32 %v1758, %v1926
        %v2110 = vadd.f32 %v1759, %v1926
        %v2111 = vadd.f32 %v1760, %v1926
        %v2112 = vadd.f32 %v1761, %v1926
        %v2113 = vadd.f32 %v1762, %v1931
        %v2114 = vadd.f32 %v1763, %v1931
        %v2115 = vadd.f32 %v1764, %v1931
        %v2116 = vadd.f32 %v1765, %v1931
        %v2117 = vadd.f32 %v1766, %v1931
        %v2118 = vadd.f32 %v1767, %v1931
        %v2119 = vadd.f32 %v1768, %v1931
        %v2120 = vadd.f32 %v1769, %v1936
        %v2121 = vadd.f32 %v1770, %v1936
        %v2122 = vadd.f32 %v1771, %v1936
        %v2123 = vadd.f32 %v1772, %v1936
        %v2124 = vadd.f32 %v1773, %v1936
        %v2125 = vadd.f32 %v1774, %v1936
        %v2126 = vadd.f32 %v1775, %v1936
        %2127 = vst [vmem:[%s221] sm:$0xff] %v1938
        %2128 = vst [vmem:[%s221 + $0x8] sm:$0xff] %v1939
        %2129 = vst [vmem:[%s221 + $0x10] sm:$0xff] %v1940
        %2130 = vst [vmem:[%s221 + $0x18] sm:$0xff] %v1941
        %2131 = vst [vmem:[%s221 + $0x20] sm:$0xff] %v1942
        %2132 = vst [vmem:[%s221 + $0x28] sm:$0xff] %v1943
        %2133 = vst.msk [vmem:[%s221 + $0x30] sm:$0xff] %vm430, %v1944
        %2134 = vst [vmem:[%s221 + $0x38] sm:$0xff] %v1945
        %2135 = vst [vmem:[%s221 + $0x40] sm:$0xff] %v1946
        %2136 = vst [vmem:[%s221 + $0x48] sm:$0xff] %v1947
        %2137 = vst [vmem:[%s221 + $0x50] sm:$0xff] %v1948
        %2138 = vst [vmem:[%s221 + $0x58] sm:$0xff] %v1949
        %2139 = vst [vmem:[%s221 + $0x60] sm:$0xff] %v1950
        %2140 = vst.msk [vmem:[%s221 + $0x68] sm:$0xff] %vm430, %v1951
        %2141 = vst [vmem:[%s221 + $0x70] sm:$0xff] %v1952
        %2142 = vst [vmem:[%s221 + $0x78] sm:$0xff] %v1953
        %2143 = vst [vmem:[%s221 + $0x80] sm:$0xff] %v1954
        %2144 = vst [vmem:[%s221 + $0x88] sm:$0xff] %v1955
        %2145 = vst [vmem:[%s221 + $0x90] sm:$0xff] %v1956
        %2146 = vst [vmem:[%s221 + $0x98] sm:$0xff] %v1957
        %2147 = vst.msk [vmem:[%s221 + $0xa0] sm:$0xff] %vm430, %v1958
        %2148 = vst [vmem:[%s221 + $0xa8] sm:$0xff] %v1959
        %2149 = vst [vmem:[%s221 + $0xb0] sm:$0xff] %v1960
        %2150 = vst [vmem:[%s221 + $0xb8] sm:$0xff] %v1961
        %2151 = vst [vmem:[%s221 + $0xc0] sm:$0xff] %v1962
        %2152 = vst [vmem:[%s221 + $0xc8] sm:$0xff] %v1963
        %2153 = vst [vmem:[%s221 + $0xd0] sm:$0xff] %v1964
        %2154 = vst.msk [vmem:[%s221 + $0xd8] sm:$0xff] %vm430, %v1965
        %2155 = vst [vmem:[%s221 + $0xe0] sm:$0xff] %v1966
        %2156 = vst [vmem:[%s221 + $0xe8] sm:$0xff] %v1967
        %2157 = vst [vmem:[%s221 + $0xf0] sm:$0xff] %v1968
        %2158 = vst [vmem:[%s221 + $0xf8] sm:$0xff] %v1969
        %2159 = vst [vmem:[%s221 + $0x100] sm:$0xff] %v1970
        %2160 = vst [vmem:[%s221 + $0x108] sm:$0xff] %v1971
        %2161 = vst.msk [vmem:[%s221 + $0x110] sm:$0xff] %vm430, %v1972
        %2162 = vst [vmem:[%s221 + $0x118] sm:$0xff] %v1973
        %2163 = vst [vmem:[%s221 + $0x120] sm:$0xff] %v1974
        %2164 = vst [vmem:[%s221 + $0x128] sm:$0xff] %v1975
        %2165 = vst [vmem:[%s221 + $0x130] sm:$0xff] %v1976
        %2166 = vst [vmem:[%s221 + $0x138] sm:$0xff] %v1977
        %2167 = vst [vmem:[%s221 + $0x140] sm:$0xff] %v1978
        %2168 = vst.msk [vmem:[%s221 + $0x148] sm:$0xff] %vm430, %v1979
        %2169 = vst [vmem:[%s221 + $0x150] sm:$0xff] %v1980
        %2170 = vst [vmem:[%s221 + $0x158] sm:$0xff] %v1981
        %2171 = vst [vmem:[%s221 + $0x160] sm:$0xff] %v1982
        %2172 = vst [vmem:[%s221 + $0x168] sm:$0xff] %v1983
        %2173 = vst [vmem:[%s221 + $0x170] sm:$0xff] %v1984
        %2174 = vst [vmem:[%s221 + $0x178] sm:$0xff] %v1985
        %2175 = vst.msk [vmem:[%s221 + $0x180] sm:$0xff] %vm430, %v1986
        %2176 = vst [vmem:[%s221 + $0x188] sm:$0xff] %v1987
        %2177 = vst [vmem:[%s221 + $0x190] sm:$0xff] %v1988
        %2178 = vst [vmem:[%s221 + $0x198] sm:$0xff] %v1989
        %2179 = vst [vmem:[%s221 + $0x1a0] sm:$0xff] %v1990
        %2180 = vst [vmem:[%s221 + $0x1a8] sm:$0xff] %v1991
        %2181 = vst [vmem:[%s221 + $0x1b0] sm:$0xff] %v1992
        %2182 = vst.msk [vmem:[%s221 + $0x1b8] sm:$0xff] %vm430, %v1993
        %2183 = vst [vmem:[%s221 + $0x1c0] sm:$0xff] %v1994
        %2184 = vst [vmem:[%s221 + $0x1c8] sm:$0xff] %v1995
        %2185 = vst [vmem:[%s221 + $0x1d0] sm:$0xff] %v1996
        %2186 = vst [vmem:[%s221 + $0x1d8] sm:$0xff] %v1997
        %2187 = vst [vmem:[%s221 + $0x1e0] sm:$0xff] %v1998
        %2188 = vst [vmem:[%s221 + $0x1e8] sm:$0xff] %v1999
        %2189 = vst.msk [vmem:[%s221 + $0x1f0] sm:$0xff] %vm430, %v2000
        %2190 = vst [vmem:[%s221 + $0x1f8] sm:$0xff] %v2001
        %2191 = vst [vmem:[%s221 + $0x200] sm:$0xff] %v2002
        %2192 = vst [vmem:[%s221 + $0x208] sm:$0xff] %v2003
        %2193 = vst [vmem:[%s221 + $0x210] sm:$0xff] %v2004
        %2194 = vst [vmem:[%s221 + $0x218] sm:$0xff] %v2005
        %2195 = vst [vmem:[%s221 + $0x220] sm:$0xff] %v2006
        %2196 = vst.msk [vmem:[%s221 + $0x228] sm:$0xff] %vm430, %v2007
        %2197 = vst [vmem:[%s221 + $0x230] sm:$0xff] %v2008
        %2198 = vst [vmem:[%s221 + $0x238] sm:$0xff] %v2009
        %2199 = vst [vmem:[%s221 + $0x240] sm:$0xff] %v2010
        %2200 = vst [vmem:[%s221 + $0x248] sm:$0xff] %v2011
        %2201 = vst [vmem:[%s221 + $0x250] sm:$0xff] %v2012
        %2202 = vst [vmem:[%s221 + $0x258] sm:$0xff] %v2013
        %2203 = vst.msk [vmem:[%s221 + $0x260] sm:$0xff] %vm430, %v2014
        %2204 = vst [vmem:[%s221 + $0x268] sm:$0xff] %v2015
        %2205 = vst [vmem:[%s221 + $0x270] sm:$0xff] %v2016
        %2206 = vst [vmem:[%s221 + $0x278] sm:$0xff] %v2017
        %2207 = vst [vmem:[%s221 + $0x280] sm:$0xff] %v2018
        %2208 = vst [vmem:[%s221 + $0x288] sm:$0xff] %v2019
        %2209 = vst [vmem:[%s221 + $0x290] sm:$0xff] %v2020
        %2210 = vst.msk [vmem:[%s221 + $0x298] sm:$0xff] %vm430, %v2021
        %2211 = vst [vmem:[%s221 + $0x2a0] sm:$0xff] %v2022
        %2212 = vst [vmem:[%s221 + $0x2a8] sm:$0xff] %v2023
        %2213 = vst [vmem:[%s221 + $0x2b0] sm:$0xff] %v2024
        %2214 = vst [vmem:[%s221 + $0x2b8] sm:$0xff] %v2025
        %2215 = vst [vmem:[%s221 + $0x2c0] sm:$0xff] %v2026
        %2216 = vst [vmem:[%s221 + $0x2c8] sm:$0xff] %v2027
        %2217 = vst.msk [vmem:[%s221 + $0x2d0] sm:$0xff] %vm430, %v2028
        %2218 = vst [vmem:[%s221 + $0x2d8] sm:$0xff] %v2029
        %2219 = vst [vmem:[%s221 + $0x2e0] sm:$0xff] %v2030
        %2220 = vst [vmem:[%s221 + $0x2e8] sm:$0xff] %v2031
        %2221 = vst [vmem:[%s221 + $0x2f0] sm:$0xff] %v2032
        %2222 = vst [vmem:[%s221 + $0x2f8] sm:$0xff] %v2033
        %2223 = vst [vmem:[%s221 + $0x300] sm:$0xff] %v2034
        %2224 = vst.msk [vmem:[%s221 + $0x308] sm:$0xff] %vm430, %v2035
        %2225 = vst [vmem:[%s221 + $0x310] sm:$0xff] %v2036
        %2226 = vst [vmem:[%s221 + $0x318] sm:$0xff] %v2037
        %2227 = vst [vmem:[%s221 + $0x320] sm:$0xff] %v2038
        %2228 = vst [vmem:[%s221 + $0x328] sm:$0xff] %v2039
        %2229 = vst [vmem:[%s221 + $0x330] sm:$0xff] %v2040
        %2230 = vst [vmem:[%s221 + $0x338] sm:$0xff] %v2041
        %2231 = vst.msk [vmem:[%s221 + $0x340] sm:$0xff] %vm430, %v2042
        %2232 = vst [vmem:[%s221 + $0x348] sm:$0xff] %v2043
        %2233 = vst [vmem:[%s221 + $0x350] sm:$0xff] %v2044
        %2234 = vst [vmem:[%s221 + $0x358] sm:$0xff] %v2045
        %2235 = vst [vmem:[%s221 + $0x360] sm:$0xff] %v2046
        %2236 = vst [vmem:[%s221 + $0x368] sm:$0xff] %v2047
        %2237 = vst [vmem:[%s221 + $0x370] sm:$0xff] %v2048
        %2238 = vst.msk [vmem:[%s221 + $0x378] sm:$0xff] %vm430, %v2049
        %2239 = vst [vmem:[%s221 + $0x380] sm:$0xff] %v2050
        %2240 = vst [vmem:[%s221 + $0x388] sm:$0xff] %v2051
        %2241 = vst [vmem:[%s221 + $0x390] sm:$0xff] %v2052
        %2242 = vst [vmem:[%s221 + $0x398] sm:$0xff] %v2053
        %2243 = vst [vmem:[%s221 + $0x3a0] sm:$0xff] %v2054
        %2244 = vst [vmem:[%s221 + $0x3a8] sm:$0xff] %v2055
        %2245 = vst.msk [vmem:[%s221 + $0x3b0] sm:$0xff] %vm430, %v2056
        %2246 = vst [vmem:[%s221 + $0x3b8] sm:$0xff] %v2057
        %2247 = vst [vmem:[%s221 + $0x3c0] sm:$0xff] %v2058
        %2248 = vst [vmem:[%s221 + $0x3c8] sm:$0xff] %v2059
        %2249 = vst [vmem:[%s221 + $0x3d0] sm:$0xff] %v2060
        %2250 = vst [vmem:[%s221 + $0x3d8] sm:$0xff] %v2061
        %2251 = vst [vmem:[%s221 + $0x3e0] sm:$0xff] %v2062
        %2252 = vst.msk [vmem:[%s221 + $0x3e8] sm:$0xff] %vm430, %v2063
        %2253 = vst [vmem:[%s221 + $0x3f0] sm:$0xff] %v2064
        %2254 = vst [vmem:[%s221 + $0x3f8] sm:$0xff] %v2065
        %2255 = vst [vmem:[%s221 + $0x400] sm:$0xff] %v2066
        %2256 = vst [vmem:[%s221 + $0x408] sm:$0xff] %v2067
        %2257 = vst [vmem:[%s221 + $0x410] sm:$0xff] %v2068
        %2258 = vst [vmem:[%s221 + $0x418] sm:$0xff] %v2069
        %2259 = vst.msk [vmem:[%s221 + $0x420] sm:$0xff] %vm430, %v2070
        %2260 = vst [vmem:[%s221 + $0x428] sm:$0xff] %v2071
        %2261 = vst [vmem:[%s221 + $0x430] sm:$0xff] %v2072
        %2262 = vst [vmem:[%s221 + $0x438] sm:$0xff] %v2073
        %2263 = vst [vmem:[%s221 + $0x440] sm:$0xff] %v2074
        %2264 = vst [vmem:[%s221 + $0x448] sm:$0xff] %v2075
        %2265 = vst [vmem:[%s221 + $0x450] sm:$0xff] %v2076
        %2266 = vst.msk [vmem:[%s221 + $0x458] sm:$0xff] %vm430, %v2077
        %2267 = vst [vmem:[%s221 + $0x460] sm:$0xff] %v2078
        %2268 = vst [vmem:[%s221 + $0x468] sm:$0xff] %v2079
        %2269 = vst [vmem:[%s221 + $0x470] sm:$0xff] %v2080
        %2270 = vst [vmem:[%s221 + $0x478] sm:$0xff] %v2081
        %2271 = vst [vmem:[%s221 + $0x480] sm:$0xff] %v2082
        %2272 = vst [vmem:[%s221 + $0x488] sm:$0xff] %v2083
        %2273 = vst.msk [vmem:[%s221 + $0x490] sm:$0xff] %vm430, %v2084
        %2274 = vst [vmem:[%s221 + $0x498] sm:$0xff] %v2085
        %2275 = vst [vmem:[%s221 + $0x4a0] sm:$0xff] %v2086
        %2276 = vst [vmem:[%s221 + $0x4a8] sm:$0xff] %v2087
        %2277 = vst [vmem:[%s221 + $0x4b0] sm:$0xff] %v2088
        %2278 = vst [vmem:[%s221 + $0x4b8] sm:$0xff] %v2089
        %2279 = vst [vmem:[%s221 + $0x4c0] sm:$0xff] %v2090
        %2280 = vst.msk [vmem:[%s221 + $0x4c8] sm:$0xff] %vm430, %v2091
        %2281 = vst [vmem:[%s221 + $0x4d0] sm:$0xff] %v2092
        %2282 = vst [vmem:[%s221 + $0x4d8] sm:$0xff] %v2093
        %2283 = vst [vmem:[%s221 + $0x4e0] sm:$0xff] %v2094
        %2284 = vst [vmem:[%s221 + $0x4e8] sm:$0xff] %v2095
        %2285 = vst [vmem:[%s221 + $0x4f0] sm:$0xff] %v2096
        %2286 = vst [vmem:[%s221 + $0x4f8] sm:$0xff] %v2097
        %2287 = vst.msk [vmem:[%s221 + $0x500] sm:$0xff] %vm430, %v2098
        %2288 = vst [vmem:[%s221 + $0x508] sm:$0xff] %v2099
        %2289 = vst [vmem:[%s221 + $0x510] sm:$0xff] %v2100
        %2290 = vst [vmem:[%s221 + $0x518] sm:$0xff] %v2101
        %2291 = vst [vmem:[%s221 + $0x520] sm:$0xff] %v2102
        %2292 = vst [vmem:[%s221 + $0x528] sm:$0xff] %v2103
        %2293 = vst [vmem:[%s221 + $0x530] sm:$0xff] %v2104
        %2294 = vst.msk [vmem:[%s221 + $0x538] sm:$0xff] %vm430, %v2105
        %2295 = vst [vmem:[%s221 + $0x540] sm:$0xff] %v2106
        %2296 = vst [vmem:[%s221 + $0x548] sm:$0xff] %v2107
        %2297 = vst [vmem:[%s221 + $0x550] sm:$0xff] %v2108
        %2298 = vst [vmem:[%s221 + $0x558] sm:$0xff] %v2109
        %2299 = vst [vmem:[%s221 + $0x560] sm:$0xff] %v2110
        %2300 = vst [vmem:[%s221 + $0x568] sm:$0xff] %v2111
        %2301 = vst.msk [vmem:[%s221 + $0x570] sm:$0xff] %vm430, %v2112
        %2302 = vst [vmem:[%s221 + $0x578] sm:$0xff] %v2113
        %2303 = vst [vmem:[%s221 + $0x580] sm:$0xff] %v2114
        %2304 = vst [vmem:[%s221 + $0x588] sm:$0xff] %v2115
        %2305 = vst [vmem:[%s221 + $0x590] sm:$0xff] %v2116
        %2306 = vst [vmem:[%s221 + $0x598] sm:$0xff] %v2117
        %2307 = vst [vmem:[%s221 + $0x5a0] sm:$0xff] %v2118
        %2308 = vst.msk [vmem:[%s221 + $0x5a8] sm:$0xff] %vm430, %v2119
        %2309 = vst [vmem:[%s221 + $0x5b0] sm:$0xff] %v2120
        %2310 = vst [vmem:[%s221 + $0x5b8] sm:$0xff] %v2121
        %2311 = vst [vmem:[%s221 + $0x5c0] sm:$0xff] %v2122
        %2312 = vst [vmem:[%s221 + $0x5c8] sm:$0xff] %v2123
        %2313 = vst [vmem:[%s221 + $0x5d0] sm:$0xff] %v2124
        %2314 = vst [vmem:[%s221 + $0x5d8] sm:$0xff] %v2125
        %2315 = vst.msk [vmem:[%s221 + $0x5e0] sm:$0xff] %vm430, %v2126
        %s2316 = sand.u32 %s106, 1
        %s2317 = scalar_lea.sflag [#allocation4], %s2316
        %s2318 = sand.u32 %s106, 1
        %s2319 = smul.addr %s2318, 1512
        %s2320 = scalar_lea.vmem [#allocation5], %s2319
        // Predicated region
        $region37: #{tpu_custom_call.1} parent=31 // pred_check
          %p2321 = pneg %p116
        $region38: #{tpu_custom_call.1} parent=31 // pred_check_branch
          %2323 = sbr.rel (%p2321) target = $region40
        $region39: #{tpu_custom_call.1} parent=31 // pred_region
          %s2324 = smul.u32 27, %s20
          %s2326 = ssub.s32 24192, 24192
          %2327 = vsyncadd %s2317, %s2326
          %s2328 = smul.addr %s2324, 7
          %s2329 = smul.addr %s2328, 128
          %s2330 = scalar_lea.hbm %s3, %s2329
          %s2331 = sshll.u32 %s2320, 4
          %s2332 = int_to_ptr.vmem [resolvable:$true] %s2331
          %2337 = dma.vmem_to_hbm [thread:$0]  %s2332, 24192, %s2330, %s2317, 896, 896, 56
        $region40: #{tpu_custom_call.1} parent=31 // pred_fallthru
          _
      $region32: #{tpu_custom_call.1} parent=5 // pred_fallthru
        _
      %p2338 = scmp.le.s32.totalorder 2, %s15
      // Predicated region
      $region41: #{tpu_custom_call.1} parent=5 // pred_check
        %p2339 = pneg %p2338
      $region42: #{tpu_custom_call.1} parent=5 // pred_check_branch
        %2341 = sbr.rel (%p2339) target = $region44
      $region43: #{tpu_custom_call.1} parent=5 // pred_region
        %s2342 = ssub.s32 %s15, 2
        // Predicated region
        $region45: #{tpu_custom_call.1} parent=43 // pred_check
          %p2343 = pneg %p122
        $region46: #{tpu_custom_call.1} parent=43 // pred_check_branch
          %2345 = sbr.rel (%p2343) target = $region48
        $region47: #{tpu_custom_call.1} parent=43 // pred_region
          %s2346 = sand.u32 %s107, 1
          %s2347 = scalar_lea.sflag [#allocation4], %s2346
          %s2348 = sand.u32 %s107, 1
          %s2349 = smul.addr %s2348, 1512
          %s2350 = scalar_lea.vmem [#allocation5], %s2349
          %2351 = dma.done %s2347, 24192
        $region48: #{tpu_custom_call.1} parent=43 // pred_fallthru
          _
      $region44: #{tpu_custom_call.1} parent=5 // pred_fallthru
        _
    $region6: #{tpu_custom_call.1} parent=1 // loop_footer
      %s19 = sadd.s32 1, %s15
    $region7: #{tpu_custom_call.1} parent=1 // loop_footer_branch
      %14 = sbr.rel target = $region3
    $region8: #{tpu_custom_call.1} parent=1 // loop_exit
      _
    %2352 = vsyncpa [#allocation3], 1
    %s2353 = scalar_lea.sflag [#allocation3], 1
    %2354 = vsyncpa %s2353, 1
    %2355 = vsyncpa [#allocation4], 1
    %s2356 = scalar_lea.sflag [#allocation4], 1
    %2357 = vsyncpa %s2356, 1

</llo_original>
